<compile_context>
chip_gen: v5e
topology: v5e:2x2
jax: 0.10.0
libtpu: 0.0.40
codegen_flags: <defaults>
</compile_context>

<pallas_src>
import functools

import jax
import jax.numpy as jnp
from jax import lax
from jax.experimental import pallas as pl
from jax.experimental.pallas import tpu as pltpu


def _fused_bigru_kernel(x_ref, wih_ref, bih_ref, whh_ref, bhn_ref, h0_ref,
                        out_ref, gates_scr, *, tp, clip_val):
    # x_ref:   (Tp, B, I)      padded input (shared by both directions)
    # wih_ref: (I, 3H)         this direction's input weights (r|z|n columns)
    # bih_ref: (1, 3H)         combined input bias (b_ih + [b_hr, b_hz, 0])
    # whh_ref: (H, 3H)         this direction's hidden weights
    # bhn_ref: (1, H)          hidden bias of the n-gate (must stay separate)
    # h0_ref:  (B, H)          this direction's initial hidden state
    # out_ref: (Tp, B, H)      this direction's clamped outputs
    # gates_scr: (Tp, B, 3H)   VMEM-resident input-side gate pre-activations
    d = pl.program_id(0)                 # 0 = forward, 1 = reverse
    _, B, I = x_ref.shape
    H = h0_ref.shape[-1]

    # ---- Fused input-side gate projection: one wide MXU matmul, kept in VMEM.
    x2d = x_ref[...].reshape(tp * B, I)
    g = jnp.dot(x2d, wih_ref[...], preferred_element_type=jnp.float32)
    gates_scr[...] = (g + bih_ref[...]).reshape(tp, B, 3 * H)

    whh = whh_ref[...]                   # weights stay resident across the loop
    bhn = bhn_ref[...]

    def step(s, h):
        # Forward walks t = s, reverse walks t = Tp-1-s.
        t = jnp.where(d == 0, s, tp - 1 - s)
        gx = gates_scr[t]                                            # (B, 3H)
        gh = jnp.dot(h, whh, preferred_element_type=jnp.float32)     # 1 MXU push / step
        r = jax.nn.sigmoid(gx[:, :H] + gh[:, :H])
        z = jax.nn.sigmoid(gx[:, H:2 * H] + gh[:, H:2 * H])
        n = jnp.tanh(gx[:, 2 * H:] + r * (gh[:, 2 * H:] + bhn))
        h_new = (1.0 - z) * n + z * h
        # Clamp fused into the store; the carried state stays unclamped
        # (PyTorch clamps only the returned outputs).
        out_ref[t] = jnp.clip(h_new, -clip_val, clip_val).astype(out_ref.dtype)
        return h_new

    lax.fori_loop(0, tp, step, h0_ref[...].astype(jnp.float32),
                  unroll=(tp <= 32))


def calcium_encoder(x, h0, w_ih, w_hh, b_ih, b_hh, *, pad=0, clip_val=5.0):
    """Bidirectional single-layer GRU encoder (Calcium_Encoder.forward).

    x:    (T, B, I) f32     input sequence
    h0:   (2, B, H) f32     initial hidden (dir 0 = forward, dir 1 = reverse)
    w_ih: (2, 3H, I) f32    input weights, PyTorch gate order (r, z, n)
    w_hh: (2, 3H, H) f32    hidden weights
    b_ih: (2, 3H) f32       input biases
    b_hh: (2, 3H) f32       hidden biases
    Returns (T + pad, B, 2H) f32, clamped to [-clip_val, clip_val].
    """
    T, B, I = x.shape
    H = w_hh.shape[-1]
    x = x.astype(jnp.float32)

    # torch.cat((leftpad, input)) — zero timesteps prepended.
    if pad > 0:
        x = jnp.concatenate([jnp.zeros((pad, B, I), x.dtype), x], axis=0)
    Tp = T + pad

    # nn.Dropout(p=0.0) is the identity -> no-op. (p > 0 training-mode dropout
    # would require pltpu PRNG; not needed for this module's defaults.)

    # One-time tiny weight/bias transforms (layout + bias folding).
    w_ih_t = jnp.transpose(w_ih, (0, 2, 1)).astype(jnp.float32)      # (2, I, 3H)
    w_hh_t = jnp.transpose(w_hh, (0, 2, 1)).astype(jnp.float32)      # (2, H, 3H)
    # Fold the hidden-side r/z biases into the input-side bias (free micro-win);
    # only b_hn must remain separate because of r * (W_hn h + b_hn).
    b_comb = b_ih.astype(jnp.float32).at[:, :2 * H].add(
        b_hh[:, :2 * H].astype(jnp.float32)).reshape(2, 1, 3 * H)
    b_hn = b_hh[:, 2 * H:].astype(jnp.float32).reshape(2, 1, H)
    h0 = h0.astype(jnp.float32)

    kernel = functools.partial(_fused_bigru_kernel, tp=Tp, clip_val=float(clip_val))

    out = pl.pallas_call(
        kernel,
        out_shape=jax.ShapeDtypeStruct((2, Tp, B, H), jnp.float32),
        grid_spec=pltpu.PrefetchScalarGridSpec(
            num_scalar_prefetch=0,
            grid=(2,),                                   # direction axis
            in_specs=[
                pl.BlockSpec((Tp, B, I), lambda d: (0, 0, 0)),          # shared x
                pl.BlockSpec((None, I, 3 * H), lambda d: (d, 0, 0)),    # W_ih[d]
                pl.BlockSpec((None, 1, 3 * H), lambda d: (d, 0, 0)),    # folded bias[d]
                pl.BlockSpec((None, H, 3 * H), lambda d: (d, 0, 0)),    # W_hh[d]
                pl.BlockSpec((None, 1, H), lambda d: (d, 0, 0)),        # b_hn[d]
                pl.BlockSpec((None, B, H), lambda d: (d, 0, 0)),        # h0[d]
            ],
            out_specs=pl.BlockSpec((None, Tp, B, H), lambda d: (d, 0, 0, 0)),
            scratch_shapes=[pltpu.VMEM((Tp, B, 3 * H), jnp.float32)],   # resident gates
        ),
        compiler_params=pltpu.CompilerParams(
            dimension_semantics=("parallel",),   # v7x: one direction per TensorCore
        ),
    )(x, w_ih_t, b_comb, w_hh_t, b_hn, h0)

    # PyTorch bidirectional layout: out[t] = [h_fwd_t ; h_rev_t].
    # (Consumers that accept the (2, Tp, B, H) layout can skip this final pass.)
    return jnp.transpose(out, (1, 2, 0, 3)).reshape(Tp, B, 2 * H)


def _reference(x, h0, w_ih, w_hh, b_ih, b_hh, pad, clip_val):
    """Pure-JAX bidirectional GRU reference (PyTorch GRU semantics)."""
    T, B, I = x.shape
    H = w_hh.shape[-1]
    x_pad = jnp.concatenate([jnp.zeros((pad, B, I), x.dtype), x], axis=0) if pad > 0 else x
    Tp = T + pad

    def cell(x_t, h_prev, d):
        gx = x_t @ w_ih[d].T + b_ih[d]
        gh = h_prev @ w_hh[d].T + b_hh[d]
        r = jax.nn.sigmoid(gx[:, :H] + gh[:, :H])
        z = jax.nn.sigmoid(gx[:, H:2 * H] + gh[:, H:2 * H])
        n = jnp.tanh(gx[:, 2 * H:] + r * gh[:, 2 * H:])
        return (1.0 - z) * n + z * h_prev

    with jax.default_matmul_precision("highest"):
        h = h0[0]
        outs_f = []
        for t in range(Tp):
            h = cell(x_pad[t], h, 0)
            outs_f.append(h)
        h = h0[1]
        outs_r = [None] * Tp
        for t in range(Tp - 1, -1, -1):
            h = cell(x_pad[t], h, 1)
            outs_r[t] = h
        out = jnp.concatenate([jnp.stack(outs_f), jnp.stack(outs_r)], axis=-1)
        return jnp.clip(out, -clip_val, clip_val)


if __name__ == "__main__":
    steps, batch, input_size, encoder_size = 8, 4, 16, 32
    pad, clip_val = 2, 5.0

    key = jax.random.PRNGKey(0)
    kx, kh, kwi, kwh, kbi, kbh = jax.random.split(key, 6)

    bound = 1.0 / (encoder_size ** 0.5)   # mimic PyTorch GRU init U(-1/sqrt(H), 1/sqrt(H))
    x = jax.random.normal(kx, (steps, batch, input_size), dtype=jnp.float32)
    h0 = jax.random.normal(kh, (2, batch, encoder_size), dtype=jnp.float32)
    w_ih = jax.random.uniform(kwi, (2, 3 * encoder_size, input_size), jnp.float32, -bound, bound)
    w_hh = jax.random.uniform(kwh, (2, 3 * encoder_size, encoder_size), jnp.float32, -bound, bound)
    b_ih = jax.random.uniform(kbi, (2, 3 * encoder_size), jnp.float32, -bound, bound)
    b_hh = jax.random.uniform(kbh, (2, 3 * encoder_size), jnp.float32, -bound, bound)

    out = calcium_encoder(x, h0, w_ih, w_hh, b_ih, b_hh, pad=pad, clip_val=clip_val)
    out = jax.block_until_ready(out)

    ref = _reference(x, h0, w_ih, w_hh, b_ih, b_hh, pad, clip_val)
    assert out.shape == (steps + pad, batch, 2 * encoder_size)
    # Tolerance covers MXU f32 matmul pass-count differences vs the XLA reference.
    assert jnp.allclose(out, ref, atol=5e-3, rtol=5e-3), float(jnp.max(jnp.abs(out - ref)))

    print("KERNEL_OK")
</pallas_src>

<mosaic_0001>
module attributes {stable_mosaic.version = 11 : i64} {
  func.func @_fused_bigru_kernel(%arg0: i32, %arg1: memref<10x4x16xf32, #tpu.memory_space<vmem>>, %arg2: memref<1x16x96xf32, #tpu.memory_space<vmem>>, %arg3: memref<1x1x96xf32, #tpu.memory_space<vmem>>, %arg4: memref<1x32x96xf32, #tpu.memory_space<vmem>>, %arg5: memref<1x1x32xf32, #tpu.memory_space<vmem>>, %arg6: memref<1x4x32xf32, #tpu.memory_space<vmem>>, %arg7: memref<1x10x4x32xf32, #tpu.memory_space<vmem>>, %arg8: memref<10x4x96xf32, #tpu.memory_space<vmem>>) attributes {dimension_semantics = [#tpu.dimension_semantics<parallel>], iteration_bounds = array<i64: 2>, scalar_prefetch = 0 : i64, scratch_operands = 1 : i64, tpu.core_type = #tpu.core_type<tc>, window_params = [{pipeline_mode = #tpu.pipeline_mode<synchronous>, transform_indices = @transform_0, window_bounds = array<i64: 10, 4, 16>}, {transform_indices = @transform_1, window_bounds = array<i64: 1, 16, 96>}, {transform_indices = @transform_2, window_bounds = array<i64: 1, 1, 96>}, {transform_indices = @transform_3, window_bounds = array<i64: 1, 32, 96>}, {transform_indices = @transform_4, window_bounds = array<i64: 1, 1, 32>}, {transform_indices = @transform_5, window_bounds = array<i64: 1, 4, 32>}, {transform_indices = @transform_6, window_bounds = array<i64: 1, 10, 4, 32>}]} {
    %c0 = arith.constant 0 : index
    %c0_0 = arith.constant 0 : index
    %c0_1 = arith.constant 0 : index
    %0 = vector.load %arg1[%c0, %c0_0, %c0_1] : memref<10x4x16xf32, #tpu.memory_space<vmem>>, vector<10x4x16xf32>
    %1 = vector.shape_cast %0 : vector<10x4x16xf32> to vector<40x16xf32>
    %c0_2 = arith.constant 0 : index
    %c0_3 = arith.constant 0 : index
    %c0_4 = arith.constant 0 : index
    %2 = vector.load %arg2[%c0_2, %c0_3, %c0_4] : memref<1x16x96xf32, #tpu.memory_space<vmem>>, vector<1x16x96xf32>
    %3 = vector.shape_cast %2 : vector<1x16x96xf32> to vector<16x96xf32>
    %cst = arith.constant dense<0.000000e+00> : vector<40x96xf32>
    %4 = tpu.matmul %1, %3, %cst {dimension_numbers = #tpu.dot_dimension_numbers<[1], [0], [0], [1], [0, 0, 1, 1], [], []>} : vector<40x16xf32>, vector<16x96xf32>, vector<40x96xf32> -> vector<40x96xf32>
    %c0_5 = arith.constant 0 : index
    %c0_6 = arith.constant 0 : index
    %c0_7 = arith.constant 0 : index
    %5 = vector.load %arg3[%c0_5, %c0_6, %c0_7] : memref<1x1x96xf32, #tpu.memory_space<vmem>>, vector<1x1x96xf32>
    %6 = vector.shape_cast %5 : vector<1x1x96xf32> to vector<1x96xf32>
    %7 = vector.broadcast %6 : vector<1x96xf32> to vector<40x96xf32>
    %8 = arith.addf %4, %7 : vector<40x96xf32>
    %9 = vector.shape_cast %8 : vector<40x96xf32> to vector<10x4x96xf32>
    %c0_8 = arith.constant 0 : index
    %c0_9 = arith.constant 0 : index
    %c0_10 = arith.constant 0 : index
    %10 = vector.load %arg8[%c0_8, %c0_9, %c0_10] : memref<10x4x96xf32, #tpu.memory_space<vmem>>, vector<10x4x96xf32>
    tpu.vector_store %arg8[%c0_8, %c0_9, %c0_10], %9 {strides = array<i32>} : memref<10x4x96xf32, #tpu.memory_space<vmem>>, vector<10x4x96xf32>,
    %c0_11 = arith.constant 0 : index
    %c0_12 = arith.constant 0 : index
    %c0_13 = arith.constant 0 : index
    %11 = vector.load %arg4[%c0_11, %c0_12, %c0_13] : memref<1x32x96xf32, #tpu.memory_space<vmem>>, vector<1x32x96xf32>
    %12 = vector.shape_cast %11 : vector<1x32x96xf32> to vector<32x96xf32>
    %c0_14 = arith.constant 0 : index
    %c0_15 = arith.constant 0 : index
    %c0_16 = arith.constant 0 : index
    %13 = vector.load %arg5[%c0_14, %c0_15, %c0_16] : memref<1x1x32xf32, #tpu.memory_space<vmem>>, vector<1x1x32xf32>
    %14 = vector.shape_cast %13 : vector<1x1x32xf32> to vector<1x32xf32>
    %c0_17 = arith.constant 0 : index
    %c0_18 = arith.constant 0 : index
    %c0_19 = arith.constant 0 : index
    %15 = vector.load %arg6[%c0_17, %c0_18, %c0_19] : memref<1x4x32xf32, #tpu.memory_space<vmem>>, vector<1x4x32xf32>
    %16 = vector.shape_cast %15 : vector<1x4x32xf32> to vector<4x32xf32>
    %c0_i32 = arith.constant 0 : i32
    %c0_i32_20 = arith.constant 0 : i32
    %17 = arith.cmpi eq, %arg0, %c0_i32_20 : i32
    %c9_i32 = arith.constant 9 : i32
    %18 = arith.subi %c9_i32, %c0_i32 : i32
    %19 = arith.select %17, %c0_i32, %18 : i32
    %20 = arith.index_cast %19 : i32 to index
    %c0_21 = arith.constant 0 : index
    %c0_22 = arith.constant 0 : index
    %21 = vector.load %arg8[%20, %c0_21, %c0_22] : memref<10x4x96xf32, #tpu.memory_space<vmem>>, vector<1x4x96xf32>
    %22 = vector.shape_cast %21 : vector<1x4x96xf32> to vector<4x96xf32>
    %cst_23 = arith.constant dense<0.000000e+00> : vector<4x96xf32>
    %23 = tpu.matmul %16, %12, %cst_23 {dimension_numbers = #tpu.dot_dimension_numbers<[1], [0], [0], [1], [0, 0, 1, 1], [], []>} : vector<4x32xf32>, vector<32x96xf32>, vector<4x96xf32> -> vector<4x96xf32>
    %24 = vector.extract_strided_slice %22 {offsets = [0, 0], sizes = [4, 32], strides = [1, 1]} : vector<4x96xf32> to vector<4x32xf32>
    %25 = vector.extract_strided_slice %23 {offsets = [0, 0], sizes = [4, 32], strides = [1, 1]} : vector<4x96xf32> to vector<4x32xf32>
    %26 = arith.addf %24, %25 : vector<4x32xf32>
    %27 = arith.negf %26 : vector<4x32xf32>
    %28 = math.exp %27 : vector<4x32xf32>
    %cst_24 = arith.constant 1.000000e+00 : f32
    %29 = vector.broadcast %cst_24 : f32 to vector<4x32xf32>
    %30 = arith.addf %29, %28 : vector<4x32xf32>
    %31 = arith.divf %29, %30 : vector<4x32xf32>
    %32 = vector.extract_strided_slice %22 {offsets = [0, 32], sizes = [4, 32], strides = [1, 1]} : vector<4x96xf32> to vector<4x32xf32>
    %33 = vector.extract_strided_slice %23 {offsets = [0, 32], sizes = [4, 32], strides = [1, 1]} : vector<4x96xf32> to vector<4x32xf32>
    %34 = arith.addf %32, %33 : vector<4x32xf32>
    %35 = arith.negf %34 : vector<4x32xf32>
    %36 = math.exp %35 : vector<4x32xf32>
    %cst_25 = arith.constant 1.000000e+00 : f32
    %37 = vector.broadcast %cst_25 : f32 to vector<4x32xf32>
    %38 = arith.addf %37, %36 : vector<4x32xf32>
    %39 = arith.divf %37, %38 : vector<4x32xf32>
    %40 = vector.extract_strided_slice %22 {offsets = [0, 64], sizes = [4, 32], strides = [1, 1]} : vector<4x96xf32> to vector<4x32xf32>
    %41 = vector.extract_strided_slice %23 {offsets = [0, 64], sizes = [4, 32], strides = [1, 1]} : vector<4x96xf32> to vector<4x32xf32>
    %42 = vector.broadcast %14 : vector<1x32xf32> to vector<4x32xf32>
    %43 = arith.addf %41, %42 : vector<4x32xf32>
    %44 = arith.mulf %31, %43 : vector<4x32xf32>
    %45 = arith.addf %40, %44 : vector<4x32xf32>
    %46 = math.tanh %45 : vector<4x32xf32>
    %cst_26 = arith.constant 1.000000e+00 : f32
    %47 = vector.broadcast %cst_26 : f32 to vector<4x32xf32>
    %48 = arith.subf %47, %39 : vector<4x32xf32>
    %49 = arith.mulf %48, %46 : vector<4x32xf32>
    %50 = arith.mulf %39, %16 : vector<4x32xf32>
    %51 = arith.addf %49, %50 : vector<4x32xf32>
    %cst_27 = arith.constant -5.000000e+00 : f32
    %cst_28 = arith.constant 5.000000e+00 : f32
    %52 = vector.broadcast %cst_27 : f32 to vector<4x32xf32>
    %53 = arith.maximumf %52, %51 : vector<4x32xf32>
    %54 = vector.broadcast %cst_28 : f32 to vector<4x32xf32>
    %55 = arith.minimumf %54, %53 : vector<4x32xf32>
    %c0_29 = arith.constant 0 : index
    %56 = arith.index_cast %19 : i32 to index
    %c0_30 = arith.constant 0 : index
    %c0_31 = arith.constant 0 : index
    %57 = vector.load %arg7[%c0_29, %56, %c0_30, %c0_31] : memref<1x10x4x32xf32, #tpu.memory_space<vmem>>, vector<1x1x4x32xf32>
    %58 = vector.shape_cast %57 : vector<1x1x4x32xf32> to vector<4x32xf32>
    %59 = vector.shape_cast %55 : vector<4x32xf32> to vector<1x1x4x32xf32>
    tpu.vector_store %arg7[%c0_29, %56, %c0_30, %c0_31], %59 {strides = array<i32>} : memref<1x10x4x32xf32, #tpu.memory_space<vmem>>, vector<1x1x4x32xf32>,
    %c1_i32 = arith.constant 1 : i32
    %c0_i32_32 = arith.constant 0 : i32
    %60 = arith.cmpi eq, %arg0, %c0_i32_32 : i32
    %c9_i32_33 = arith.constant 9 : i32
    %61 = arith.subi %c9_i32_33, %c1_i32 : i32
    %62 = arith.select %60, %c1_i32, %61 : i32
    %63 = arith.index_cast %62 : i32 to index
    %c0_34 = arith.constant 0 : index
    %c0_35 = arith.constant 0 : index
    %64 = vector.load %arg8[%63, %c0_34, %c0_35] : memref<10x4x96xf32, #tpu.memory_space<vmem>>, vector<1x4x96xf32>
    %65 = vector.shape_cast %64 : vector<1x4x96xf32> to vector<4x96xf32>
    %cst_36 = arith.constant dense<0.000000e+00> : vector<4x96xf32>
    %66 = tpu.matmul %51, %12, %cst_36 {dimension_numbers = #tpu.dot_dimension_numbers<[1], [0], [0], [1], [0, 0, 1, 1], [], []>} : vector<4x32xf32>, vector<32x96xf32>, vector<4x96xf32> -> vector<4x96xf32>
    %67 = vector.extract_strided_slice %65 {offsets = [0, 0], sizes = [4, 32], strides = [1, 1]} : vector<4x96xf32> to vector<4x32xf32>
    %68 = vector.extract_strided_slice %66 {offsets = [0, 0], sizes = [4, 32], strides = [1, 1]} : vector<4x96xf32> to vector<4x32xf32>
    %69 = arith.addf %67, %68 : vector<4x32xf32>
    %70 = arith.negf %69 : vector<4x32xf32>
    %71 = math.exp %70 : vector<4x32xf32>
    %cst_37 = arith.constant 1.000000e+00 : f32
    %72 = vector.broadcast %cst_37 : f32 to vector<4x32xf32>
    %73 = arith.addf %72, %71 : vector<4x32xf32>
    %74 = arith.divf %72, %73 : vector<4x32xf32>
    %75 = vector.extract_strided_slice %65 {offsets = [0, 32], sizes = [4, 32], strides = [1, 1]} : vector<4x96xf32> to vector<4x32xf32>
    %76 = vector.extract_strided_slice %66 {offsets = [0, 32], sizes = [4, 32], strides = [1, 1]} : vector<4x96xf32> to vector<4x32xf32>
    %77 = arith.addf %75, %76 : vector<4x32xf32>
    %78 = arith.negf %77 : vector<4x32xf32>
    %79 = math.exp %78 : vector<4x32xf32>
    %cst_38 = arith.constant 1.000000e+00 : f32
    %80 = vector.broadcast %cst_38 : f32 to vector<4x32xf32>
    %81 = arith.addf %80, %79 : vector<4x32xf32>
    %82 = arith.divf %80, %81 : vector<4x32xf32>
    %83 = vector.extract_strided_slice %65 {offsets = [0, 64], sizes = [4, 32], strides = [1, 1]} : vector<4x96xf32> to vector<4x32xf32>
    %84 = vector.extract_strided_slice %66 {offsets = [0, 64], sizes = [4, 32], strides = [1, 1]} : vector<4x96xf32> to vector<4x32xf32>
    %85 = vector.broadcast %14 : vector<1x32xf32> to vector<4x32xf32>
    %86 = arith.addf %84, %85 : vector<4x32xf32>
    %87 = arith.mulf %74, %86 : vector<4x32xf32>
    %88 = arith.addf %83, %87 : vector<4x32xf32>
    %89 = math.tanh %88 : vector<4x32xf32>
    %cst_39 = arith.constant 1.000000e+00 : f32
    %90 = vector.broadcast %cst_39 : f32 to vector<4x32xf32>
    %91 = arith.subf %90, %82 : vector<4x32xf32>
    %92 = arith.mulf %91, %89 : vector<4x32xf32>
    %93 = arith.mulf %82, %51 : vector<4x32xf32>
    %94 = arith.addf %92, %93 : vector<4x32xf32>
    %cst_40 = arith.constant -5.000000e+00 : f32
    %cst_41 = arith.constant 5.000000e+00 : f32
    %95 = vector.broadcast %cst_40 : f32 to vector<4x32xf32>
    %96 = arith.maximumf %95, %94 : vector<4x32xf32>
    %97 = vector.broadcast %cst_41 : f32 to vector<4x32xf32>
    %98 = arith.minimumf %97, %96 : vector<4x32xf32>
    %c0_42 = arith.constant 0 : index
    %99 = arith.index_cast %62 : i32 to index
    %c0_43 = arith.constant 0 : index
    %c0_44 = arith.constant 0 : index
    %100 = vector.load %arg7[%c0_42, %99, %c0_43, %c0_44] : memref<1x10x4x32xf32, #tpu.memory_space<vmem>>, vector<1x1x4x32xf32>
    %101 = vector.shape_cast %100 : vector<1x1x4x32xf32> to vector<4x32xf32>
    %102 = vector.shape_cast %98 : vector<4x32xf32> to vector<1x1x4x32xf32>
    tpu.vector_store %arg7[%c0_42, %99, %c0_43, %c0_44], %102 {strides = array<i32>} : memref<1x10x4x32xf32, #tpu.memory_space<vmem>>, vector<1x1x4x32xf32>,
    %c2_i32 = arith.constant 2 : i32
    %c0_i32_45 = arith.constant 0 : i32
    %103 = arith.cmpi eq, %arg0, %c0_i32_45 : i32
    %c9_i32_46 = arith.constant 9 : i32
    %104 = arith.subi %c9_i32_46, %c2_i32 : i32
    %105 = arith.select %103, %c2_i32, %104 : i32
    %106 = arith.index_cast %105 : i32 to index
    %c0_47 = arith.constant 0 : index
    %c0_48 = arith.constant 0 : index
    %107 = vector.load %arg8[%106, %c0_47, %c0_48] : memref<10x4x96xf32, #tpu.memory_space<vmem>>, vector<1x4x96xf32>
    %108 = vector.shape_cast %107 : vector<1x4x96xf32> to vector<4x96xf32>
    %cst_49 = arith.constant dense<0.000000e+00> : vector<4x96xf32>
    %109 = tpu.matmul %94, %12, %cst_49 {dimension_numbers = #tpu.dot_dimension_numbers<[1], [0], [0], [1], [0, 0, 1, 1], [], []>} : vector<4x32xf32>, vector<32x96xf32>, vector<4x96xf32> -> vector<4x96xf32>
    %110 = vector.extract_strided_slice %108 {offsets = [0, 0], sizes = [4, 32], strides = [1, 1]} : vector<4x96xf32> to vector<4x32xf32>
    %111 = vector.extract_strided_slice %109 {offsets = [0, 0], sizes = [4, 32], strides = [1, 1]} : vector<4x96xf32> to vector<4x32xf32>
    %112 = arith.addf %110, %111 : vector<4x32xf32>
    %113 = arith.negf %112 : vector<4x32xf32>
    %114 = math.exp %113 : vector<4x32xf32>
    %cst_50 = arith.constant 1.000000e+00 : f32
    %115 = vector.broadcast %cst_50 : f32 to vector<4x32xf32>
    %116 = arith.addf %115, %114 : vector<4x32xf32>
    %117 = arith.divf %115, %116 : vector<4x32xf32>
    %118 = vector.extract_strided_slice %108 {offsets = [0, 32], sizes = [4, 32], strides = [1, 1]} : vector<4x96xf32> to vector<4x32xf32>
    %119 = vector.extract_strided_slice %109 {offsets = [0, 32], sizes = [4, 32], strides = [1, 1]} : vector<4x96xf32> to vector<4x32xf32>
    %120 = arith.addf %118, %119 : vector<4x32xf32>
    %121 = arith.negf %120 : vector<4x32xf32>
    %122 = math.exp %121 : vector<4x32xf32>
    %cst_51 = arith.constant 1.000000e+00 : f32
    %123 = vector.broadcast %cst_51 : f32 to vector<4x32xf32>
    %124 = arith.addf %123, %122 : vector<4x32xf32>
    %125 = arith.divf %123, %124 : vector<4x32xf32>
    %126 = vector.extract_strided_slice %108 {offsets = [0, 64], sizes = [4, 32], strides = [1, 1]} : vector<4x96xf32> to vector<4x32xf32>
    %127 = vector.extract_strided_slice %109 {offsets = [0, 64], sizes = [4, 32], strides = [1, 1]} : vector<4x96xf32> to vector<4x32xf32>
    %128 = vector.broadcast %14 : vector<1x32xf32> to vector<4x32xf32>
    %129 = arith.addf %127, %128 : vector<4x32xf32>
    %130 = arith.mulf %117, %129 : vector<4x32xf32>
    %131 = arith.addf %126, %130 : vector<4x32xf32>
    %132 = math.tanh %131 : vector<4x32xf32>
    %cst_52 = arith.constant 1.000000e+00 : f32
    %133 = vector.broadcast %cst_52 : f32 to vector<4x32xf32>
    %134 = arith.subf %133, %125 : vector<4x32xf32>
    %135 = arith.mulf %134, %132 : vector<4x32xf32>
    %136 = arith.mulf %125, %94 : vector<4x32xf32>
    %137 = arith.addf %135, %136 : vector<4x32xf32>
    %cst_53 = arith.constant -5.000000e+00 : f32
    %cst_54 = arith.constant 5.000000e+00 : f32
    %138 = vector.broadcast %cst_53 : f32 to vector<4x32xf32>
    %139 = arith.maximumf %138, %137 : vector<4x32xf32>
    %140 = vector.broadcast %cst_54 : f32 to vector<4x32xf32>
    %141 = arith.minimumf %140, %139 : vector<4x32xf32>
    %c0_55 = arith.constant 0 : index
    %142 = arith.index_cast %105 : i32 to index
    %c0_56 = arith.constant 0 : index
    %c0_57 = arith.constant 0 : index
    %143 = vector.load %arg7[%c0_55, %142, %c0_56, %c0_57] : memref<1x10x4x32xf32, #tpu.memory_space<vmem>>, vector<1x1x4x32xf32>
    %144 = vector.shape_cast %143 : vector<1x1x4x32xf32> to vector<4x32xf32>
    %145 = vector.shape_cast %141 : vector<4x32xf32> to vector<1x1x4x32xf32>
    tpu.vector_store %arg7[%c0_55, %142, %c0_56, %c0_57], %145 {strides = array<i32>} : memref<1x10x4x32xf32, #tpu.memory_space<vmem>>, vector<1x1x4x32xf32>,
    %c3_i32 = arith.constant 3 : i32
    %c0_i32_58 = arith.constant 0 : i32
    %146 = arith.cmpi eq, %arg0, %c0_i32_58 : i32
    %c9_i32_59 = arith.constant 9 : i32
    %147 = arith.subi %c9_i32_59, %c3_i32 : i32
    %148 = arith.select %146, %c3_i32, %147 : i32
    %149 = arith.index_cast %148 : i32 to index
    %c0_60 = arith.constant 0 : index
    %c0_61 = arith.constant 0 : index
    %150 = vector.load %arg8[%149, %c0_60, %c0_61] : memref<10x4x96xf32, #tpu.memory_space<vmem>>, vector<1x4x96xf32>
    %151 = vector.shape_cast %150 : vector<1x4x96xf32> to vector<4x96xf32>
    %cst_62 = arith.constant dense<0.000000e+00> : vector<4x96xf32>
    %152 = tpu.matmul %137, %12, %cst_62 {dimension_numbers = #tpu.dot_dimension_numbers<[1], [0], [0], [1], [0, 0, 1, 1], [], []>} : vector<4x32xf32>, vector<32x96xf32>, vector<4x96xf32> -> vector<4x96xf32>
    %153 = vector.extract_strided_slice %151 {offsets = [0, 0], sizes = [4, 32], strides = [1, 1]} : vector<4x96xf32> to vector<4x32xf32>
    %154 = vector.extract_strided_slice %152 {offsets = [0, 0], sizes = [4, 32], strides = [1, 1]} : vector<4x96xf32> to vector<4x32xf32>
    %155 = arith.addf %153, %154 : vector<4x32xf32>
    %156 = arith.negf %155 : vector<4x32xf32>
    %157 = math.exp %156 : vector<4x32xf32>
    %cst_63 = arith.constant 1.000000e+00 : f32
    %158 = vector.broadcast %cst_63 : f32 to vector<4x32xf32>
    %159 = arith.addf %158, %157 : vector<4x32xf32>
    %160 = arith.divf %158, %159 : vector<4x32xf32>
    %161 = vector.extract_strided_slice %151 {offsets = [0, 32], sizes = [4, 32], strides = [1, 1]} : vector<4x96xf32> to vector<4x32xf32>
    %162 = vector.extract_strided_slice %152 {offsets = [0, 32], sizes = [4, 32], strides = [1, 1]} : vector<4x96xf32> to vector<4x32xf32>
    %163 = arith.addf %161, %162 : vector<4x32xf32>
    %164 = arith.negf %163 : vector<4x32xf32>
    %165 = math.exp %164 : vector<4x32xf32>
    %cst_64 = arith.constant 1.000000e+00 : f32
    %166 = vector.broadcast %cst_64 : f32 to vector<4x32xf32>
    %167 = arith.addf %166, %165 : vector<4x32xf32>
    %168 = arith.divf %166, %167 : vector<4x32xf32>
    %169 = vector.extract_strided_slice %151 {offsets = [0, 64], sizes = [4, 32], strides = [1, 1]} : vector<4x96xf32> to vector<4x32xf32>
    %170 = vector.extract_strided_slice %152 {offsets = [0, 64], sizes = [4, 32], strides = [1, 1]} : vector<4x96xf32> to vector<4x32xf32>
    %171 = vector.broadcast %14 : vector<1x32xf32> to vector<4x32xf32>
    %172 = arith.addf %170, %171 : vector<4x32xf32>
    %173 = arith.mulf %160, %172 : vector<4x32xf32>
    %174 = arith.addf %169, %173 : vector<4x32xf32>
    %175 = math.tanh %174 : vector<4x32xf32>
    %cst_65 = arith.constant 1.000000e+00 : f32
    %176 = vector.broadcast %cst_65 : f32 to vector<4x32xf32>
    %177 = arith.subf %176, %168 : vector<4x32xf32>
    %178 = arith.mulf %177, %175 : vector<4x32xf32>
    %179 = arith.mulf %168, %137 : vector<4x32xf32>
    %180 = arith.addf %178, %179 : vector<4x32xf32>
    %cst_66 = arith.constant -5.000000e+00 : f32
    %cst_67 = arith.constant 5.000000e+00 : f32
    %181 = vector.broadcast %cst_66 : f32 to vector<4x32xf32>
    %182 = arith.maximumf %181, %180 : vector<4x32xf32>
    %183 = vector.broadcast %cst_67 : f32 to vector<4x32xf32>
    %184 = arith.minimumf %183, %182 : vector<4x32xf32>
    %c0_68 = arith.constant 0 : index
    %185 = arith.index_cast %148 : i32 to index
    %c0_69 = arith.constant 0 : index
    %c0_70 = arith.constant 0 : index
    %186 = vector.load %arg7[%c0_68, %185, %c0_69, %c0_70] : memref<1x10x4x32xf32, #tpu.memory_space<vmem>>, vector<1x1x4x32xf32>
    %187 = vector.shape_cast %186 : vector<1x1x4x32xf32> to vector<4x32xf32>
    %188 = vector.shape_cast %184 : vector<4x32xf32> to vector<1x1x4x32xf32>
    tpu.vector_store %arg7[%c0_68, %185, %c0_69, %c0_70], %188 {strides = array<i32>} : memref<1x10x4x32xf32, #tpu.memory_space<vmem>>, vector<1x1x4x32xf32>,
    %c4_i32 = arith.constant 4 : i32
    %c0_i32_71 = arith.constant 0 : i32
    %189 = arith.cmpi eq, %arg0, %c0_i32_71 : i32
    %c9_i32_72 = arith.constant 9 : i32
    %190 = arith.subi %c9_i32_72, %c4_i32 : i32
    %191 = arith.select %189, %c4_i32, %190 : i32
    %192 = arith.index_cast %191 : i32 to index
    %c0_73 = arith.constant 0 : index
    %c0_74 = arith.constant 0 : index
    %193 = vector.load %arg8[%192, %c0_73, %c0_74] : memref<10x4x96xf32, #tpu.memory_space<vmem>>, vector<1x4x96xf32>
    %194 = vector.shape_cast %193 : vector<1x4x96xf32> to vector<4x96xf32>
    %cst_75 = arith.constant dense<0.000000e+00> : vector<4x96xf32>
    %195 = tpu.matmul %180, %12, %cst_75 {dimension_numbers = #tpu.dot_dimension_numbers<[1], [0], [0], [1], [0, 0, 1, 1], [], []>} : vector<4x32xf32>, vector<32x96xf32>, vector<4x96xf32> -> vector<4x96xf32>
    %196 = vector.extract_strided_slice %194 {offsets = [0, 0], sizes = [4, 32], strides = [1, 1]} : vector<4x96xf32> to vector<4x32xf32>
    %197 = vector.extract_strided_slice %195 {offsets = [0, 0], sizes = [4, 32], strides = [1, 1]} : vector<4x96xf32> to vector<4x32xf32>
    %198 = arith.addf %196, %197 : vector<4x32xf32>
    %199 = arith.negf %198 : vector<4x32xf32>
    %200 = math.exp %199 : vector<4x32xf32>
    %cst_76 = arith.constant 1.000000e+00 : f32
    %201 = vector.broadcast %cst_76 : f32 to vector<4x32xf32>
    %202 = arith.addf %201, %200 : vector<4x32xf32>
    %203 = arith.divf %201, %202 : vector<4x32xf32>
    %204 = vector.extract_strided_slice %194 {offsets = [0, 32], sizes = [4, 32], strides = [1, 1]} : vector<4x96xf32> to vector<4x32xf32>
    %205 = vector.extract_strided_slice %195 {offsets = [0, 32], sizes = [4, 32], strides = [1, 1]} : vector<4x96xf32> to vector<4x32xf32>
    %206 = arith.addf %204, %205 : vector<4x32xf32>
    %207 = arith.negf %206 : vector<4x32xf32>
    %208 = math.exp %207 : vector<4x32xf32>
    %cst_77 = arith.constant 1.000000e+00 : f32
    %209 = vector.broadcast %cst_77 : f32 to vector<4x32xf32>
    %210 = arith.addf %209, %208 : vector<4x32xf32>
    %211 = arith.divf %209, %210 : vector<4x32xf32>
    %212 = vector.extract_strided_slice %194 {offsets = [0, 64], sizes = [4, 32], strides = [1, 1]} : vector<4x96xf32> to vector<4x32xf32>
    %213 = vector.extract_strided_slice %195 {offsets = [0, 64], sizes = [4, 32], strides = [1, 1]} : vector<4x96xf32> to vector<4x32xf32>
    %214 = vector.broadcast %14 : vector<1x32xf32> to vector<4x32xf32>
    %215 = arith.addf %213, %214 : vector<4x32xf32>
    %216 = arith.mulf %203, %215 : vector<4x32xf32>
    %217 = arith.addf %212, %216 : vector<4x32xf32>
    %218 = math.tanh %217 : vector<4x32xf32>
    %cst_78 = arith.constant 1.000000e+00 : f32
    %219 = vector.broadcast %cst_78 : f32 to vector<4x32xf32>
    %220 = arith.subf %219, %211 : vector<4x32xf32>
    %221 = arith.mulf %220, %218 : vector<4x32xf32>
    %222 = arith.mulf %211, %180 : vector<4x32xf32>
    %223 = arith.addf %221, %222 : vector<4x32xf32>
    %cst_79 = arith.constant -5.000000e+00 : f32
    %cst_80 = arith.constant 5.000000e+00 : f32
    %224 = vector.broadcast %cst_79 : f32 to vector<4x32xf32>
    %225 = arith.maximumf %224, %223 : vector<4x32xf32>
    %226 = vector.broadcast %cst_80 : f32 to vector<4x32xf32>
    %227 = arith.minimumf %226, %225 : vector<4x32xf32>
    %c0_81 = arith.constant 0 : index
    %228 = arith.index_cast %191 : i32 to index
    %c0_82 = arith.constant 0 : index
    %c0_83 = arith.constant 0 : index
    %229 = vector.load %arg7[%c0_81, %228, %c0_82, %c0_83] : memref<1x10x4x32xf32, #tpu.memory_space<vmem>>, vector<1x1x4x32xf32>
    %230 = vector.shape_cast %229 : vector<1x1x4x32xf32> to vector<4x32xf32>
    %231 = vector.shape_cast %227 : vector<4x32xf32> to vector<1x1x4x32xf32>
    tpu.vector_store %arg7[%c0_81, %228, %c0_82, %c0_83], %231 {strides = array<i32>} : memref<1x10x4x32xf32, #tpu.memory_space<vmem>>, vector<1x1x4x32xf32>,
    %c5_i32 = arith.constant 5 : i32
    %c0_i32_84 = arith.constant 0 : i32
    %232 = arith.cmpi eq, %arg0, %c0_i32_84 : i32
    %c9_i32_85 = arith.constant 9 : i32
    %233 = arith.subi %c9_i32_85, %c5_i32 : i32
    %234 = arith.select %232, %c5_i32, %233 : i32
    %235 = arith.index_cast %234 : i32 to index
    %c0_86 = arith.constant 0 : index
    %c0_87 = arith.constant 0 : index
    %236 = vector.load %arg8[%235, %c0_86, %c0_87] : memref<10x4x96xf32, #tpu.memory_space<vmem>>, vector<1x4x96xf32>
    %237 = vector.shape_cast %236 : vector<1x4x96xf32> to vector<4x96xf32>
    %cst_88 = arith.constant dense<0.000000e+00> : vector<4x96xf32>
    %238 = tpu.matmul %223, %12, %cst_88 {dimension_numbers = #tpu.dot_dimension_numbers<[1], [0], [0], [1], [0, 0, 1, 1], [], []>} : vector<4x32xf32>, vector<32x96xf32>, vector<4x96xf32> -> vector<4x96xf32>
    %239 = vector.extract_strided_slice %237 {offsets = [0, 0], sizes = [4, 32], strides = [1, 1]} : vector<4x96xf32> to vector<4x32xf32>
    %240 = vector.extract_strided_slice %238 {offsets = [0, 0], sizes = [4, 32], strides = [1, 1]} : vector<4x96xf32> to vector<4x32xf32>
    %241 = arith.addf %239, %240 : vector<4x32xf32>
    %242 = arith.negf %241 : vector<4x32xf32>
    %243 = math.exp %242 : vector<4x32xf32>
    %cst_89 = arith.constant 1.000000e+00 : f32
    %244 = vector.broadcast %cst_89 : f32 to vector<4x32xf32>
    %245 = arith.addf %244, %243 : vector<4x32xf32>
    %246 = arith.divf %244, %245 : vector<4x32xf32>
    %247 = vector.extract_strided_slice %237 {offsets = [0, 32], sizes = [4, 32], strides = [1, 1]} : vector<4x96xf32> to vector<4x32xf32>
    %248 = vector.extract_strided_slice %238 {offsets = [0, 32], sizes = [4, 32], strides = [1, 1]} : vector<4x96xf32> to vector<4x32xf32>
    %249 = arith.addf %247, %248 : vector<4x32xf32>
    %250 = arith.negf %249 : vector<4x32xf32>
    %251 = math.exp %250 : vector<4x32xf32>
    %cst_90 = arith.constant 1.000000e+00 : f32
    %252 = vector.broadcast %cst_90 : f32 to vector<4x32xf32>
    %253 = arith.addf %252, %251 : vector<4x32xf32>
    %254 = arith.divf %252, %253 : vector<4x32xf32>
    %255 = vector.extract_strided_slice %237 {offsets = [0, 64], sizes = [4, 32], strides = [1, 1]} : vector<4x96xf32> to vector<4x32xf32>
    %256 = vector.extract_strided_slice %238 {offsets = [0, 64], sizes = [4, 32], strides = [1, 1]} : vector<4x96xf32> to vector<4x32xf32>
    %257 = vector.broadcast %14 : vector<1x32xf32> to vector<4x32xf32>
    %258 = arith.addf %256, %257 : vector<4x32xf32>
    %259 = arith.mulf %246, %258 : vector<4x32xf32>
    %260 = arith.addf %255, %259 : vector<4x32xf32>
    %261 = math.tanh %260 : vector<4x32xf32>
    %cst_91 = arith.constant 1.000000e+00 : f32
    %262 = vector.broadcast %cst_91 : f32 to vector<4x32xf32>
    %263 = arith.subf %262, %254 : vector<4x32xf32>
    %264 = arith.mulf %263, %261 : vector<4x32xf32>
    %265 = arith.mulf %254, %223 : vector<4x32xf32>
    %266 = arith.addf %264, %265 : vector<4x32xf32>
    %cst_92 = arith.constant -5.000000e+00 : f32
    %cst_93 = arith.constant 5.000000e+00 : f32
    %267 = vector.broadcast %cst_92 : f32 to vector<4x32xf32>
    %268 = arith.maximumf %267, %266 : vector<4x32xf32>
    %269 = vector.broadcast %cst_93 : f32 to vector<4x32xf32>
    %270 = arith.minimumf %269, %268 : vector<4x32xf32>
    %c0_94 = arith.constant 0 : index
    %271 = arith.index_cast %234 : i32 to index
    %c0_95 = arith.constant 0 : index
    %c0_96 = arith.constant 0 : index
    %272 = vector.load %arg7[%c0_94, %271, %c0_95, %c0_96] : memref<1x10x4x32xf32, #tpu.memory_space<vmem>>, vector<1x1x4x32xf32>
    %273 = vector.shape_cast %272 : vector<1x1x4x32xf32> to vector<4x32xf32>
    %274 = vector.shape_cast %270 : vector<4x32xf32> to vector<1x1x4x32xf32>
    tpu.vector_store %arg7[%c0_94, %271, %c0_95, %c0_96], %274 {strides = array<i32>} : memref<1x10x4x32xf32, #tpu.memory_space<vmem>>, vector<1x1x4x32xf32>,
    %c6_i32 = arith.constant 6 : i32
    %c0_i32_97 = arith.constant 0 : i32
    %275 = arith.cmpi eq, %arg0, %c0_i32_97 : i32
    %c9_i32_98 = arith.constant 9 : i32
    %276 = arith.subi %c9_i32_98, %c6_i32 : i32
    %277 = arith.select %275, %c6_i32, %276 : i32
    %278 = arith.index_cast %277 : i32 to index
    %c0_99 = arith.constant 0 : index
    %c0_100 = arith.constant 0 : index
    %279 = vector.load %arg8[%278, %c0_99, %c0_100] : memref<10x4x96xf32, #tpu.memory_space<vmem>>, vector<1x4x96xf32>
    %280 = vector.shape_cast %279 : vector<1x4x96xf32> to vector<4x96xf32>
    %cst_101 = arith.constant dense<0.000000e+00> : vector<4x96xf32>
    %281 = tpu.matmul %266, %12, %cst_101 {dimension_numbers = #tpu.dot_dimension_numbers<[1], [0], [0], [1], [0, 0, 1, 1], [], []>} : vector<4x32xf32>, vector<32x96xf32>, vector<4x96xf32> -> vector<4x96xf32>
    %282 = vector.extract_strided_slice %280 {offsets = [0, 0], sizes = [4, 32], strides = [1, 1]} : vector<4x96xf32> to vector<4x32xf32>
    %283 = vector.extract_strided_slice %281 {offsets = [0, 0], sizes = [4, 32], strides = [1, 1]} : vector<4x96xf32> to vector<4x32xf32>
    %284 = arith.addf %282, %283 : vector<4x32xf32>
    %285 = arith.negf %284 : vector<4x32xf32>
    %286 = math.exp %285 : vector<4x32xf32>
    %cst_102 = arith.constant 1.000000e+00 : f32
    %287 = vector.broadcast %cst_102 : f32 to vector<4x32xf32>
    %288 = arith.addf %287, %286 : vector<4x32xf32>
    %289 = arith.divf %287, %288 : vector<4x32xf32>
    %290 = vector.extract_strided_slice %280 {offsets = [0, 32], sizes = [4, 32], strides = [1, 1]} : vector<4x96xf32> to vector<4x32xf32>
    %291 = vector.extract_strided_slice %281 {offsets = [0, 32], sizes = [4, 32], strides = [1, 1]} : vector<4x96xf32> to vector<4x32xf32>
    %292 = arith.addf %290, %291 : vector<4x32xf32>
    %293 = arith.negf %292 : vector<4x32xf32>
    %294 = math.exp %293 : vector<4x32xf32>
    %cst_103 = arith.constant 1.000000e+00 : f32
    %295 = vector.broadcast %cst_103 : f32 to vector<4x32xf32>
    %296 = arith.addf %295, %294 : vector<4x32xf32>
    %297 = arith.divf %295, %296 : vector<4x32xf32>
    %298 = vector.extract_strided_slice %280 {offsets = [0, 64], sizes = [4, 32], strides = [1, 1]} : vector<4x96xf32> to vector<4x32xf32>
    %299 = vector.extract_strided_slice %281 {offsets = [0, 64], sizes = [4, 32], strides = [1, 1]} : vector<4x96xf32> to vector<4x32xf32>
    %300 = vector.broadcast %14 : vector<1x32xf32> to vector<4x32xf32>
    %301 = arith.addf %299, %300 : vector<4x32xf32>
    %302 = arith.mulf %289, %301 : vector<4x32xf32>
    %303 = arith.addf %298, %302 : vector<4x32xf32>
    %304 = math.tanh %303 : vector<4x32xf32>
    %cst_104 = arith.constant 1.000000e+00 : f32
    %305 = vector.broadcast %cst_104 : f32 to vector<4x32xf32>
    %306 = arith.subf %305, %297 : vector<4x32xf32>
    %307 = arith.mulf %306, %304 : vector<4x32xf32>
    %308 = arith.mulf %297, %266 : vector<4x32xf32>
    %309 = arith.addf %307, %308 : vector<4x32xf32>
    %cst_105 = arith.constant -5.000000e+00 : f32
    %cst_106 = arith.constant 5.000000e+00 : f32
    %310 = vector.broadcast %cst_105 : f32 to vector<4x32xf32>
    %311 = arith.maximumf %310, %309 : vector<4x32xf32>
    %312 = vector.broadcast %cst_106 : f32 to vector<4x32xf32>
    %313 = arith.minimumf %312, %311 : vector<4x32xf32>
    %c0_107 = arith.constant 0 : index
    %314 = arith.index_cast %277 : i32 to index
    %c0_108 = arith.constant 0 : index
    %c0_109 = arith.constant 0 : index
    %315 = vector.load %arg7[%c0_107, %314, %c0_108, %c0_109] : memref<1x10x4x32xf32, #tpu.memory_space<vmem>>, vector<1x1x4x32xf32>
    %316 = vector.shape_cast %315 : vector<1x1x4x32xf32> to vector<4x32xf32>
    %317 = vector.shape_cast %313 : vector<4x32xf32> to vector<1x1x4x32xf32>
    tpu.vector_store %arg7[%c0_107, %314, %c0_108, %c0_109], %317 {strides = array<i32>} : memref<1x10x4x32xf32, #tpu.memory_space<vmem>>, vector<1x1x4x32xf32>,
    %c7_i32 = arith.constant 7 : i32
    %c0_i32_110 = arith.constant 0 : i32
    %318 = arith.cmpi eq, %arg0, %c0_i32_110 : i32
    %c9_i32_111 = arith.constant 9 : i32
    %319 = arith.subi %c9_i32_111, %c7_i32 : i32
    %320 = arith.select %318, %c7_i32, %319 : i32
    %321 = arith.index_cast %320 : i32 to index
    %c0_112 = arith.constant 0 : index
    %c0_113 = arith.constant 0 : index
    %322 = vector.load %arg8[%321, %c0_112, %c0_113] : memref<10x4x96xf32, #tpu.memory_space<vmem>>, vector<1x4x96xf32>
    %323 = vector.shape_cast %322 : vector<1x4x96xf32> to vector<4x96xf32>
    %cst_114 = arith.constant dense<0.000000e+00> : vector<4x96xf32>
    %324 = tpu.matmul %309, %12, %cst_114 {dimension_numbers = #tpu.dot_dimension_numbers<[1], [0], [0], [1], [0, 0, 1, 1], [], []>} : vector<4x32xf32>, vector<32x96xf32>, vector<4x96xf32> -> vector<4x96xf32>
    %325 = vector.extract_strided_slice %323 {offsets = [0, 0], sizes = [4, 32], strides = [1, 1]} : vector<4x96xf32> to vector<4x32xf32>
    %326 = vector.extract_strided_slice %324 {offsets = [0, 0], sizes = [4, 32], strides = [1, 1]} : vector<4x96xf32> to vector<4x32xf32>
    %327 = arith.addf %325, %326 : vector<4x32xf32>
    %328 = arith.negf %327 : vector<4x32xf32>
    %329 = math.exp %328 : vector<4x32xf32>
    %cst_115 = arith.constant 1.000000e+00 : f32
    %330 = vector.broadcast %cst_115 : f32 to vector<4x32xf32>
    %331 = arith.addf %330, %329 : vector<4x32xf32>
    %332 = arith.divf %330, %331 : vector<4x32xf32>
    %333 = vector.extract_strided_slice %323 {offsets = [0, 32], sizes = [4, 32], strides = [1, 1]} : vector<4x96xf32> to vector<4x32xf32>
    %334 = vector.extract_strided_slice %324 {offsets = [0, 32], sizes = [4, 32], strides = [1, 1]} : vector<4x96xf32> to vector<4x32xf32>
    %335 = arith.addf %333, %334 : vector<4x32xf32>
    %336 = arith.negf %335 : vector<4x32xf32>
    %337 = math.exp %336 : vector<4x32xf32>
    %cst_116 = arith.constant 1.000000e+00 : f32
    %338 = vector.broadcast %cst_116 : f32 to vector<4x32xf32>
    %339 = arith.addf %338, %337 : vector<4x32xf32>
    %340 = arith.divf %338, %339 : vector<4x32xf32>
    %341 = vector.extract_strided_slice %323 {offsets = [0, 64], sizes = [4, 32], strides = [1, 1]} : vector<4x96xf32> to vector<4x32xf32>
    %342 = vector.extract_strided_slice %324 {offsets = [0, 64], sizes = [4, 32], strides = [1, 1]} : vector<4x96xf32> to vector<4x32xf32>
    %343 = vector.broadcast %14 : vector<1x32xf32> to vector<4x32xf32>
    %344 = arith.addf %342, %343 : vector<4x32xf32>
    %345 = arith.mulf %332, %344 : vector<4x32xf32>
    %346 = arith.addf %341, %345 : vector<4x32xf32>
    %347 = math.tanh %346 : vector<4x32xf32>
    %cst_117 = arith.constant 1.000000e+00 : f32
    %348 = vector.broadcast %cst_117 : f32 to vector<4x32xf32>
    %349 = arith.subf %348, %340 : vector<4x32xf32>
    %350 = arith.mulf %349, %347 : vector<4x32xf32>
    %351 = arith.mulf %340, %309 : vector<4x32xf32>
    %352 = arith.addf %350, %351 : vector<4x32xf32>
    %cst_118 = arith.constant -5.000000e+00 : f32
    %cst_119 = arith.constant 5.000000e+00 : f32
    %353 = vector.broadcast %cst_118 : f32 to vector<4x32xf32>
    %354 = arith.maximumf %353, %352 : vector<4x32xf32>
    %355 = vector.broadcast %cst_119 : f32 to vector<4x32xf32>
    %356 = arith.minimumf %355, %354 : vector<4x32xf32>
    %c0_120 = arith.constant 0 : index
    %357 = arith.index_cast %320 : i32 to index
    %c0_121 = arith.constant 0 : index
    %c0_122 = arith.constant 0 : index
    %358 = vector.load %arg7[%c0_120, %357, %c0_121, %c0_122] : memref<1x10x4x32xf32, #tpu.memory_space<vmem>>, vector<1x1x4x32xf32>
    %359 = vector.shape_cast %358 : vector<1x1x4x32xf32> to vector<4x32xf32>
    %360 = vector.shape_cast %356 : vector<4x32xf32> to vector<1x1x4x32xf32>
    tpu.vector_store %arg7[%c0_120, %357, %c0_121, %c0_122], %360 {strides = array<i32>} : memref<1x10x4x32xf32, #tpu.memory_space<vmem>>, vector<1x1x4x32xf32>,
    %c8_i32 = arith.constant 8 : i32
    %c0_i32_123 = arith.constant 0 : i32
    %361 = arith.cmpi eq, %arg0, %c0_i32_123 : i32
    %c9_i32_124 = arith.constant 9 : i32
    %362 = arith.subi %c9_i32_124, %c8_i32 : i32
    %363 = arith.select %361, %c8_i32, %362 : i32
    %364 = arith.index_cast %363 : i32 to index
    %c0_125 = arith.constant 0 : index
    %c0_126 = arith.constant 0 : index
    %365 = vector.load %arg8[%364, %c0_125, %c0_126] : memref<10x4x96xf32, #tpu.memory_space<vmem>>, vector<1x4x96xf32>
    %366 = vector.shape_cast %365 : vector<1x4x96xf32> to vector<4x96xf32>
    %cst_127 = arith.constant dense<0.000000e+00> : vector<4x96xf32>
    %367 = tpu.matmul %352, %12, %cst_127 {dimension_numbers = #tpu.dot_dimension_numbers<[1], [0], [0], [1], [0, 0, 1, 1], [], []>} : vector<4x32xf32>, vector<32x96xf32>, vector<4x96xf32> -> vector<4x96xf32>
    %368 = vector.extract_strided_slice %366 {offsets = [0, 0], sizes = [4, 32], strides = [1, 1]} : vector<4x96xf32> to vector<4x32xf32>
    %369 = vector.extract_strided_slice %367 {offsets = [0, 0], sizes = [4, 32], strides = [1, 1]} : vector<4x96xf32> to vector<4x32xf32>
    %370 = arith.addf %368, %369 : vector<4x32xf32>
    %371 = arith.negf %370 : vector<4x32xf32>
    %372 = math.exp %371 : vector<4x32xf32>
    %cst_128 = arith.constant 1.000000e+00 : f32
    %373 = vector.broadcast %cst_128 : f32 to vector<4x32xf32>
    %374 = arith.addf %373, %372 : vector<4x32xf32>
    %375 = arith.divf %373, %374 : vector<4x32xf32>
    %376 = vector.extract_strided_slice %366 {offsets = [0, 32], sizes = [4, 32], strides = [1, 1]} : vector<4x96xf32> to vector<4x32xf32>
    %377 = vector.extract_strided_slice %367 {offsets = [0, 32], sizes = [4, 32], strides = [1, 1]} : vector<4x96xf32> to vector<4x32xf32>
    %378 = arith.addf %376, %377 : vector<4x32xf32>
    %379 = arith.negf %378 : vector<4x32xf32>
    %380 = math.exp %379 : vector<4x32xf32>
    %cst_129 = arith.constant 1.000000e+00 : f32
    %381 = vector.broadcast %cst_129 : f32 to vector<4x32xf32>
    %382 = arith.addf %381, %380 : vector<4x32xf32>
    %383 = arith.divf %381, %382 : vector<4x32xf32>
    %384 = vector.extract_strided_slice %366 {offsets = [0, 64], sizes = [4, 32], strides = [1, 1]} : vector<4x96xf32> to vector<4x32xf32>
    %385 = vector.extract_strided_slice %367 {offsets = [0, 64], sizes = [4, 32], strides = [1, 1]} : vector<4x96xf32> to vector<4x32xf32>
    %386 = vector.broadcast %14 : vector<1x32xf32> to vector<4x32xf32>
    %387 = arith.addf %385, %386 : vector<4x32xf32>
    %388 = arith.mulf %375, %387 : vector<4x32xf32>
    %389 = arith.addf %384, %388 : vector<4x32xf32>
    %390 = math.tanh %389 : vector<4x32xf32>
    %cst_130 = arith.constant 1.000000e+00 : f32
    %391 = vector.broadcast %cst_130 : f32 to vector<4x32xf32>
    %392 = arith.subf %391, %383 : vector<4x32xf32>
    %393 = arith.mulf %392, %390 : vector<4x32xf32>
    %394 = arith.mulf %383, %352 : vector<4x32xf32>
    %395 = arith.addf %393, %394 : vector<4x32xf32>
    %cst_131 = arith.constant -5.000000e+00 : f32
    %cst_132 = arith.constant 5.000000e+00 : f32
    %396 = vector.broadcast %cst_131 : f32 to vector<4x32xf32>
    %397 = arith.maximumf %396, %395 : vector<4x32xf32>
    %398 = vector.broadcast %cst_132 : f32 to vector<4x32xf32>
    %399 = arith.minimumf %398, %397 : vector<4x32xf32>
    %c0_133 = arith.constant 0 : index
    %400 = arith.index_cast %363 : i32 to index
    %c0_134 = arith.constant 0 : index
    %c0_135 = arith.constant 0 : index
    %401 = vector.load %arg7[%c0_133, %400, %c0_134, %c0_135] : memref<1x10x4x32xf32, #tpu.memory_space<vmem>>, vector<1x1x4x32xf32>
    %402 = vector.shape_cast %401 : vector<1x1x4x32xf32> to vector<4x32xf32>
    %403 = vector.shape_cast %399 : vector<4x32xf32> to vector<1x1x4x32xf32>
    tpu.vector_store %arg7[%c0_133, %400, %c0_134, %c0_135], %403 {strides = array<i32>} : memref<1x10x4x32xf32, #tpu.memory_space<vmem>>, vector<1x1x4x32xf32>,
    %c9_i32_136 = arith.constant 9 : i32
    %c0_i32_137 = arith.constant 0 : i32
    %404 = arith.cmpi eq, %arg0, %c0_i32_137 : i32
    %c9_i32_138 = arith.constant 9 : i32
    %405 = arith.subi %c9_i32_138, %c9_i32_136 : i32
    %406 = arith.select %404, %c9_i32_136, %405 : i32
    %407 = arith.index_cast %406 : i32 to index
    %c0_139 = arith.constant 0 : index
    %c0_140 = arith.constant 0 : index
    %408 = vector.load %arg8[%407, %c0_139, %c0_140] : memref<10x4x96xf32, #tpu.memory_space<vmem>>, vector<1x4x96xf32>
    %409 = vector.shape_cast %408 : vector<1x4x96xf32> to vector<4x96xf32>
    %cst_141 = arith.constant dense<0.000000e+00> : vector<4x96xf32>
    %410 = tpu.matmul %395, %12, %cst_141 {dimension_numbers = #tpu.dot_dimension_numbers<[1], [0], [0], [1], [0, 0, 1, 1], [], []>} : vector<4x32xf32>, vector<32x96xf32>, vector<4x96xf32> -> vector<4x96xf32>
    %411 = vector.extract_strided_slice %409 {offsets = [0, 0], sizes = [4, 32], strides = [1, 1]} : vector<4x96xf32> to vector<4x32xf32>
    %412 = vector.extract_strided_slice %410 {offsets = [0, 0], sizes = [4, 32], strides = [1, 1]} : vector<4x96xf32> to vector<4x32xf32>
    %413 = arith.addf %411, %412 : vector<4x32xf32>
    %414 = arith.negf %413 : vector<4x32xf32>
    %415 = math.exp %414 : vector<4x32xf32>
    %cst_142 = arith.constant 1.000000e+00 : f32
    %416 = vector.broadcast %cst_142 : f32 to vector<4x32xf32>
    %417 = arith.addf %416, %415 : vector<4x32xf32>
    %418 = arith.divf %416, %417 : vector<4x32xf32>
    %419 = vector.extract_strided_slice %409 {offsets = [0, 32], sizes = [4, 32], strides = [1, 1]} : vector<4x96xf32> to vector<4x32xf32>
    %420 = vector.extract_strided_slice %410 {offsets = [0, 32], sizes = [4, 32], strides = [1, 1]} : vector<4x96xf32> to vector<4x32xf32>
    %421 = arith.addf %419, %420 : vector<4x32xf32>
    %422 = arith.negf %421 : vector<4x32xf32>
    %423 = math.exp %422 : vector<4x32xf32>
    %cst_143 = arith.constant 1.000000e+00 : f32
    %424 = vector.broadcast %cst_143 : f32 to vector<4x32xf32>
    %425 = arith.addf %424, %423 : vector<4x32xf32>
    %426 = arith.divf %424, %425 : vector<4x32xf32>
    %427 = vector.extract_strided_slice %409 {offsets = [0, 64], sizes = [4, 32], strides = [1, 1]} : vector<4x96xf32> to vector<4x32xf32>
    %428 = vector.extract_strided_slice %410 {offsets = [0, 64], sizes = [4, 32], strides = [1, 1]} : vector<4x96xf32> to vector<4x32xf32>
    %429 = vector.broadcast %14 : vector<1x32xf32> to vector<4x32xf32>
    %430 = arith.addf %428, %429 : vector<4x32xf32>
    %431 = arith.mulf %418, %430 : vector<4x32xf32>
    %432 = arith.addf %427, %431 : vector<4x32xf32>
    %433 = math.tanh %432 : vector<4x32xf32>
    %cst_144 = arith.constant 1.000000e+00 : f32
    %434 = vector.broadcast %cst_144 : f32 to vector<4x32xf32>
    %435 = arith.subf %434, %426 : vector<4x32xf32>
    %436 = arith.mulf %435, %433 : vector<4x32xf32>
    %437 = arith.mulf %426, %395 : vector<4x32xf32>
    %438 = arith.addf %436, %437 : vector<4x32xf32>
    %cst_145 = arith.constant -5.000000e+00 : f32
    %cst_146 = arith.constant 5.000000e+00 : f32
    %439 = vector.broadcast %cst_145 : f32 to vector<4x32xf32>
    %440 = arith.maximumf %439, %438 : vector<4x32xf32>
    %441 = vector.broadcast %cst_146 : f32 to vector<4x32xf32>
    %442 = arith.minimumf %441, %440 : vector<4x32xf32>
    %c0_147 = arith.constant 0 : index
    %443 = arith.index_cast %406 : i32 to index
    %c0_148 = arith.constant 0 : index
    %c0_149 = arith.constant 0 : index
    %444 = vector.load %arg7[%c0_147, %443, %c0_148, %c0_149] : memref<1x10x4x32xf32, #tpu.memory_space<vmem>>, vector<1x1x4x32xf32>
    %445 = vector.shape_cast %444 : vector<1x1x4x32xf32> to vector<4x32xf32>
    %446 = vector.shape_cast %442 : vector<4x32xf32> to vector<1x1x4x32xf32>
    tpu.vector_store %arg7[%c0_147, %443, %c0_148, %c0_149], %446 {strides = array<i32>} : memref<1x10x4x32xf32, #tpu.memory_space<vmem>>, vector<1x1x4x32xf32>,
    %c10_i32 = arith.constant 10 : i32
    return
  }
  func.func @transform_0(%arg0: i32) -> (i32, i32, i32) {
    %c0_i32 = arith.constant 0 : i32
    %c0_i32_0 = arith.constant 0 : i32
    %c0_i32_1 = arith.constant 0 : i32
    %c0_i32_2 = arith.constant 0 : i32
    return %c0_i32, %c0_i32_0, %c0_i32_1 : i32, i32, i32
  }
  func.func @transform_1(%arg0: i32) -> (i32, i32, i32) {
    %c0_i32 = arith.constant 0 : i32
    %c0_i32_0 = arith.constant 0 : i32
    %c0_i32_1 = arith.constant 0 : i32
    return %arg0, %c0_i32, %c0_i32_0 : i32, i32, i32
  }
  func.func @transform_2(%arg0: i32) -> (i32, i32, i32) {
    %c0_i32 = arith.constant 0 : i32
    %c0_i32_0 = arith.constant 0 : i32
    %c0_i32_1 = arith.constant 0 : i32
    return %arg0, %c0_i32, %c0_i32_0 : i32, i32, i32
  }
  func.func @transform_3(%arg0: i32) -> (i32, i32, i32) {
    %c0_i32 = arith.constant 0 : i32
    %c0_i32_0 = arith.constant 0 : i32
    %c0_i32_1 = arith.constant 0 : i32
    return %arg0, %c0_i32, %c0_i32_0 : i32, i32, i32
  }
  func.func @transform_4(%arg0: i32) -> (i32, i32, i32) {
    %c0_i32 = arith.constant 0 : i32
    %c0_i32_0 = arith.constant 0 : i32
    %c0_i32_1 = arith.constant 0 : i32
    return %arg0, %c0_i32, %c0_i32_0 : i32, i32, i32
  }
  func.func @transform_5(%arg0: i32) -> (i32, i32, i32) {
    %c0_i32 = arith.constant 0 : i32
    %c0_i32_0 = arith.constant 0 : i32
    %c0_i32_1 = arith.constant 0 : i32
    return %arg0, %c0_i32, %c0_i32_0 : i32, i32, i32
  }
  func.func @transform_6(%arg0: i32) -> (i32, i32, i32, i32) {
    %c0_i32 = arith.constant 0 : i32
    %c0_i32_0 = arith.constant 0 : i32
    %c0_i32_1 = arith.constant 0 : i32
    %c0_i32_2 = arith.constant 0 : i32
    return %arg0, %c0_i32, %c0_i32_0, %c0_i32_1 : i32, i32, i32, i32
  }
}

</mosaic_0001>

<llo_original>
// kernel: tpu_custom_call.1
$region0: #{tpu_custom_call.1}
  #allocation0 [shape = 'u32[]', space=smem, size = 0x4, offset = 0x4, fixed_abs, tag = 'smem constant byte address 0x4 - core index']
  #allocation1 [shape = 'u32[72,128]{1,0:T(1,128)}', space=vmem, size = 0x9000, scoped, tag = 'internal scratch']
  #allocation2 [shape = 'f32[10,4,96]{2,1,0:T(4,128)}', space=vmem, size = 0x5000, scoped, tag = 'scratch operand']
  %s0 = inlined_call_operand.hbm [shape: f32[10,4,16], index: 0, kind: input, shape index: {}]
  %s1 = inlined_call_operand.hbm [shape: f32[2,16,96], index: 1, kind: input, shape index: {}]
  %s2 = inlined_call_operand.hbm [shape: f32[2,1,96], index: 2, kind: input, shape index: {}]
  %s3 = inlined_call_operand.hbm [shape: f32[2,32,96], index: 3, kind: input, shape index: {}]
  %s4 = inlined_call_operand.vmem [shape: f32[2,1,32], index: 4, kind: input, shape index: {}]
  %s5 = inlined_call_operand.hbm [shape: f32[2,4,32], index: 5, kind: input, shape index: {}]
  %s6 = inlined_call_operand.hbm [shape: f32[2,10,4,32], index: 6, kind: output, shape index: {}]
  %s7 = sld [smem:[#allocation0]]
  $region77: #{tpu_custom_call.1} parent=0
    _
  %s9 = ssub.s32 1, %s7
  %s10 = scalar_select 0, %s9, %s7
  $region1: #{tpu_custom_call.1} parent=0
    #allocation3 [shape = 'u8[20480]{0}', space=vmem, size = 0x5000, scoped, tag = 'input window, operand 0, single buffered']
    #allocation4 [shape = 's32[2]{0}', space=sflag, size = 0x8, scoped, tag = 'scoped memory for tpu_custom_call.1']
    #allocation5 [shape = 's32[2]{0}', space=sflag, size = 0x8, scoped, tag = 'scoped memory for tpu_custom_call.1']
    #allocation6 [shape = 'u8[16384]{0}', space=vmem, size = 0x4000, scoped, tag = 'input window, operand 1']
    #allocation7 [shape = 's32[2]{0}', space=sflag, size = 0x8, scoped, tag = 'scoped memory for tpu_custom_call.1']
    #allocation8 [shape = 'u8[1024]{0}', space=vmem, size = 0x400, scoped, tag = 'input window, operand 2']
    #allocation9 [shape = 'u8[32768]{0}', space=vmem, size = 0x8000, scoped, tag = 'input window, operand 3']
    #allocation10 [shape = 's32[2]{0}', space=sflag, size = 0x8, scoped, tag = 'scoped memory for tpu_custom_call.1']
    #allocation11 [shape = 'u8[4096]{0}', space=vmem, size = 0x1000, scoped, tag = 'input window, operand 5']
    #allocation12 [shape = 'u8[40960]{0}', space=vmem, size = 0xa000, scoped, tag = 'output window, operand 0']
    %11 = vsyncpa [#allocation4], 0
    %12 = vsyncpa [#allocation7], 0
    %s13 = scalar_lea.sflag [#allocation7], 1
    %14 = vsyncpa %s13, 0
    %15 = vsyncpa [#allocation10], 0
    %s16 = scalar_lea.sflag [#allocation10], 1
    %17 = vsyncpa %s16, 0
    %18 = vsyncpa [#allocation5], 0
    %s19 = scalar_lea.sflag [#allocation5], 1
    %20 = vsyncpa %s19, 0
    loop: start=0, step=1, limit=4
    $region2: #{tpu_custom_call.1} parent=1 // loop_pre_header
      _
    $region3: #{tpu_custom_call.1} parent=1 // loop_header
      %s22 = sphi 0, %s26
      %p23 = scmp.ge.s32.totalorder %s22, 4
      %s30 = sphi 0, %s30
      %s32 = sphi 0, %s30
      %s33 = sphi 0, %s32
      %s47 = sphi 0, %s33
      %s53 = sphi 0, %s55
      %s56 = sphi 0, %s53
      %s57 = sphi 0, %s56
      %s73 = sphi 0, %s57
      %s79 = sphi 0, %s81
      %s82 = sphi 0, %s79
      %s83 = sphi 0, %s82
      %s99 = sphi 0, %s83
      %s105 = sphi 0, %s107
      %s108 = sphi 0, %s105
      %s109 = sphi 0, %s108
      %s125 = sphi 0, %s109
      %s131 = sphi 0, %s133
      %s134 = sphi 0, %s131
      %s135 = sphi 0, %s134
      %s151 = sphi 0, %s135
      %s157 = sphi 0, %s159
      %s160 = sphi 0, %s157
      %s161 = sphi 0, %s160
      %s177 = sphi 0, %s161
      %s183 = sphi 0, %s185
      %s186 = sphi 0, %s183
      %s187 = sphi 0, %s186
      %s203 = sphi 0, %s187
    $region4: #{tpu_custom_call.1} parent=1 // loop_header_branch
      %25 = sbr.rel (%p23) target = $region8
    $region5: #{tpu_custom_call.1} parent=1 // loop_body
      %s27 = ssub.s32 %s22, 1
      %s28 = ssub.s32 %s22, 2
      %s29 = sadd.s32 %s22, 1
      %s31 = sadd.s32 %s30, 1
      %p34 = scmp.eq.s32.totalorder %s22, 1
      %p35 = scmp.ne.s32.totalorder %s30, %s32
      %p36 = scmp.eq.s32.totalorder %s22, 0
      %p37 = por %p35, %p36
      %p38 = scmp.ne.s32.totalorder %s30, %s32
      %p39 = scmp.eq.s32.totalorder %s27, 1
      %p40 = por %p38, %p39
      %p41 = scmp.ne.s32.totalorder %s32, %s33
      %p42 = scmp.eq.s32.totalorder %s27, 0
      %p43 = por %p41, %p42
      %p44 = scmp.ne.s32.totalorder %s32, %s33
      %p45 = scmp.eq.s32.totalorder %s28, 1
      %p46 = por %p44, %p45
      %p48 = scmp.ne.s32.totalorder %s33, %s47
      %p49 = scmp.eq.s32.totalorder %s28, 0
      %p50 = por %p48, %p49
      %s51 = ssub.s32 %s22, %s29
      %p52 = scmp.eq.s32.totalorder %s51, 0
      %s54 = sadd.s32 %s53, 1
      %s55 = scalar_select %p52, %s53, %s54
      %p58 = pneg %p52
      %p59 = scmp.eq.s32.totalorder %s22, 1
      %p60 = por %p58, %p59
      %p61 = scmp.ne.s32.totalorder %s53, %s56
      %p62 = scmp.eq.s32.totalorder %s22, 0
      %p63 = por %p61, %p62
      %p64 = scmp.ne.s32.totalorder %s53, %s56
      %p65 = scmp.eq.s32.totalorder %s27, 1
      %p66 = por %p64, %p65
      %p67 = scmp.ne.s32.totalorder %s56, %s57
      %p68 = scmp.eq.s32.totalorder %s27, 0
      %p69 = por %p67, %p68
      %p70 = scmp.ne.s32.totalorder %s56, %s57
      %p71 = scmp.eq.s32.totalorder %s28, 1
      %p72 = por %p70, %p71
      %p74 = scmp.ne.s32.totalorder %s57, %s73
      %p75 = scmp.eq.s32.totalorder %s28, 0
      %p76 = por %p74, %p75
      %s77 = ssub.s32 %s22, %s29
      %p78 = scmp.eq.s32.totalorder %s77, 0
      %s80 = sadd.s32 %s79, 1
      %s81 = scalar_select %p78, %s79, %s80
      %p84 = pneg %p78
      %p85 = scmp.eq.s32.totalorder %s22, 1
      %p86 = por %p84, %p85
      %p87 = scmp.ne.s32.totalorder %s79, %s82
      %p88 = scmp.eq.s32.totalorder %s22, 0
      %p89 = por %p87, %p88
      %p90 = scmp.ne.s32.totalorder %s79, %s82
      %p91 = scmp.eq.s32.totalorder %s27, 1
      %p92 = por %p90, %p91
      %p93 = scmp.ne.s32.totalorder %s82, %s83
      %p94 = scmp.eq.s32.totalorder %s27, 0
      %p95 = por %p93, %p94
      %p96 = scmp.ne.s32.totalorder %s82, %s83
      %p97 = scmp.eq.s32.totalorder %s28, 1
      %p98 = por %p96, %p97
      %p100 = scmp.ne.s32.totalorder %s83, %s99
      %p101 = scmp.eq.s32.totalorder %s28, 0
      %p102 = por %p100, %p101
      %s103 = ssub.s32 %s22, %s29
      %p104 = scmp.eq.s32.totalorder %s103, 0
      %s106 = sadd.s32 %s105, 1
      %s107 = scalar_select %p104, %s105, %s106
      %p110 = pneg %p104
      %p111 = scmp.eq.s32.totalorder %s22, 1
      %p112 = por %p110, %p111
      %p113 = scmp.ne.s32.totalorder %s105, %s108
      %p114 = scmp.eq.s32.totalorder %s22, 0
      %p115 = por %p113, %p114
      %p116 = scmp.ne.s32.totalorder %s105, %s108
      %p117 = scmp.eq.s32.totalorder %s27, 1
      %p118 = por %p116, %p117
      %p119 = scmp.ne.s32.totalorder %s108, %s109
      %p120 = scmp.eq.s32.totalorder %s27, 0
      %p121 = por %p119, %p120
      %p122 = scmp.ne.s32.totalorder %s108, %s109
      %p123 = scmp.eq.s32.totalorder %s28, 1
      %p124 = por %p122, %p123
      %p126 = scmp.ne.s32.totalorder %s109, %s125
      %p127 = scmp.eq.s32.totalorder %s28, 0
      %p128 = por %p126, %p127
      %s129 = ssub.s32 %s22, %s29
      %p130 = scmp.eq.s32.totalorder %s129, 0
      %s132 = sadd.s32 %s131, 1
      %s133 = scalar_select %p130, %s131, %s132
      %p136 = pneg %p130
      %p137 = scmp.eq.s32.totalorder %s22, 1
      %p138 = por %p136, %p137
      %p139 = scmp.ne.s32.totalorder %s131, %s134
      %p140 = scmp.eq.s32.totalorder %s22, 0
      %p141 = por %p139, %p140
      %p142 = scmp.ne.s32.totalorder %s131, %s134
      %p143 = scmp.eq.s32.totalorder %s27, 1
      %p144 = por %p142, %p143
      %p145 = scmp.ne.s32.totalorder %s134, %s135
      %p146 = scmp.eq.s32.totalorder %s27, 0
      %p147 = por %p145, %p146
      %p148 = scmp.ne.s32.totalorder %s134, %s135
      %p149 = scmp.eq.s32.totalorder %s28, 1
      %p150 = por %p148, %p149
      %p152 = scmp.ne.s32.totalorder %s135, %s151
      %p153 = scmp.eq.s32.totalorder %s28, 0
      %p154 = por %p152, %p153
      %s155 = ssub.s32 %s22, %s29
      %p156 = scmp.eq.s32.totalorder %s155, 0
      %s158 = sadd.s32 %s157, 1
      %s159 = scalar_select %p156, %s157, %s158
      %p162 = pneg %p156
      %p163 = scmp.eq.s32.totalorder %s22, 1
      %p164 = por %p162, %p163
      %p165 = scmp.ne.s32.totalorder %s157, %s160
      %p166 = scmp.eq.s32.totalorder %s22, 0
      %p167 = por %p165, %p166
      %p168 = scmp.ne.s32.totalorder %s157, %s160
      %p169 = scmp.eq.s32.totalorder %s27, 1
      %p170 = por %p168, %p169
      %p171 = scmp.ne.s32.totalorder %s160, %s161
      %p172 = scmp.eq.s32.totalorder %s27, 0
      %p173 = por %p171, %p172
      %p174 = scmp.ne.s32.totalorder %s160, %s161
      %p175 = scmp.eq.s32.totalorder %s28, 1
      %p176 = por %p174, %p175
      %p178 = scmp.ne.s32.totalorder %s161, %s177
      %p179 = scmp.eq.s32.totalorder %s28, 0
      %p180 = por %p178, %p179
      %s181 = ssub.s32 %s22, %s29
      %p182 = scmp.eq.s32.totalorder %s181, 0
      %s184 = sadd.s32 %s183, 1
      %s185 = scalar_select %p182, %s183, %s184
      %p188 = pneg %p182
      %p189 = scmp.eq.s32.totalorder %s22, 1
      %p190 = por %p188, %p189
      %p191 = scmp.ne.s32.totalorder %s183, %s186
      %p192 = scmp.eq.s32.totalorder %s22, 0
      %p193 = por %p191, %p192
      %p194 = scmp.ne.s32.totalorder %s183, %s186
      %p195 = scmp.eq.s32.totalorder %s27, 1
      %p196 = por %p194, %p195
      %p197 = scmp.ne.s32.totalorder %s186, %s187
      %p198 = scmp.eq.s32.totalorder %s27, 0
      %p199 = por %p197, %p198
      %p200 = scmp.ne.s32.totalorder %s186, %s187
      %p201 = scmp.eq.s32.totalorder %s28, 1
      %p202 = por %p200, %p201
      %p204 = scmp.ne.s32.totalorder %s187, %s203
      %p205 = scmp.eq.s32.totalorder %s28, 0
      %p206 = por %p204, %p205
      %p207 = scmp.le.s32.totalorder 1, %s22
      %p208 = scmp.lt.s32.totalorder %s22, 3
      %p209 = pnand %p207, %p208
      %p210 = pneg %p209
      // Predicated region
      $region9: #{tpu_custom_call.1} parent=5 // pred_check
        _
      $region10: #{tpu_custom_call.1} parent=5 // pred_check_branch
        %212 = sbr.rel (%p209) target = $region12
      $region11: #{tpu_custom_call.1} parent=5 // pred_region
        %s213 = ssub.s32 %s22, 1
        // Predicated region
        $region13: #{tpu_custom_call.1} parent=11 // pred_check
          %p214 = pneg %p43
        $region14: #{tpu_custom_call.1} parent=11 // pred_check_branch
          %216 = sbr.rel (%p214) target = $region16
        $region15: #{tpu_custom_call.1} parent=11 // pred_region
          %218 = vsyncadd [#allocation4], 0
          %s219 = sshll.u32 %s0, 4
          %s220 = int_to_ptr.hbm [resolvable:$true] %s219
          %s221 = sshll.u32 [#allocation3], 4
          %s222 = int_to_ptr.vmem [resolvable:$true] %s221
          %227 = dma.hbm_to_vmem [thread:$0]  %s220, 640, %s222, [#allocation4], 64, 64, 4
        $region16: #{tpu_custom_call.1} parent=11 // pred_fallthru
          _
      $region12: #{tpu_custom_call.1} parent=5 // pred_fallthru
        _
      %p228 = scmp.lt.s32.totalorder %s22, 2
      // Predicated region
      $region17: #{tpu_custom_call.1} parent=5 // pred_check
        %p229 = pneg %p228
      $region18: #{tpu_custom_call.1} parent=5 // pred_check_branch
        %231 = sbr.rel (%p229) target = $region20
      $region19: #{tpu_custom_call.1} parent=5 // pred_region
        // Predicated region
        $region21: #{tpu_custom_call.1} parent=19 // pred_check
          %p232 = pneg %p63
        $region22: #{tpu_custom_call.1} parent=19 // pred_check_branch
          %234 = sbr.rel (%p232) target = $region24
        $region23: #{tpu_custom_call.1} parent=19 // pred_region
          %s235 = sand.u32 %s22, 1
          %s236 = scalar_lea.sflag [#allocation7], %s235
          %s237 = sand.u32 %s53, 1
          %s238 = smul.addr %s237, 16
          %s239 = scalar_lea.vmem [#allocation6], %s238
          %241 = vsyncadd %s236, 0
          %s242 = smul.addr %s22, 2
          %s243 = smul.addr %s242, 8
          %s244 = scalar_lea.hbm %s1, %s243
          %s245 = sshll.u32 %s244, 4
          %s246 = int_to_ptr.hbm [resolvable:$true] %s245
          %s247 = sshll.u32 %s239, 4
          %s248 = int_to_ptr.vmem [resolvable:$true] %s247
          %253 = dma.hbm_to_vmem [thread:$0]  %s246, 256, %s248, %s236, 128, 128, 8
        $region24: #{tpu_custom_call.1} parent=19 // pred_fallthru
          _
        // Predicated region
        $region25: #{tpu_custom_call.1} parent=19 // pred_check
          %p254 = pneg %p89
        $region26: #{tpu_custom_call.1} parent=19 // pred_check_branch
          %256 = sbr.rel (%p254) target = $region28
        $region27: #{tpu_custom_call.1} parent=19 // pred_region
          %s257 = sand.u32 %s22, 1
          %s258 = scalar_lea.sflag [#allocation7], %s257
          %s259 = sand.u32 %s79, 1
          %s260 = scalar_lea.vmem [#allocation8], %s259
          %262 = vsyncadd %s258, 0
          %s263 = scalar_lea.hbm %s2, %s22
          %s265 = sshll.u32 %s263, 4
          %s266 = int_to_ptr.hbm [resolvable:$true] %s265
          %s267 = sshll.u32 %s260, 4
          %s268 = int_to_ptr.vmem [resolvable:$true] %s267
          %270 = dma.hbm_to_vmem [thread:$0]  %s266, 16, %s268, %s258
        $region28: #{tpu_custom_call.1} parent=19 // pred_fallthru
          _
        // Predicated region
        $region29: #{tpu_custom_call.1} parent=19 // pred_check
          %p271 = pneg %p115
        $region30: #{tpu_custom_call.1} parent=19 // pred_check_branch
          %273 = sbr.rel (%p271) target = $region32
        $region31: #{tpu_custom_call.1} parent=19 // pred_region
          %s274 = sand.u32 %s22, 1
          %s275 = scalar_lea.sflag [#allocation10], %s274
          %s276 = sand.u32 %s105, 1
          %s277 = smul.addr %s276, 32
          %s278 = scalar_lea.vmem [#allocation9], %s277
          %280 = vsyncadd %s275, 0
          %s281 = smul.addr %s22, 4
          %s282 = smul.addr %s281, 8
          %s283 = scalar_lea.hbm %s3, %s282
          %s284 = sshll.u32 %s283, 4
          %s285 = int_to_ptr.hbm [resolvable:$true] %s284
          %s286 = sshll.u32 %s278, 4
          %s287 = int_to_ptr.vmem [resolvable:$true] %s286
          %292 = dma.hbm_to_vmem [thread:$0]  %s285, 512, %s287, %s275, 128, 128, 8
        $region32: #{tpu_custom_call.1} parent=19 // pred_fallthru
          _
        // Predicated region
        $region33: #{tpu_custom_call.1} parent=19 // pred_check
          %p293 = pneg %p141
        $region34: #{tpu_custom_call.1} parent=19 // pred_check_branch
          %295 = sbr.rel (%p293) target = $region36
        $region35: #{tpu_custom_call.1} parent=19 // pred_region
          %p296 = scmp.lt.s32.totalorder %s22, 1
          %s297 = scalar_select %p296, %s22, 1
          %s298 = scalar_lea.vmem %s4, %s297
        $region36: #{tpu_custom_call.1} parent=19 // pred_fallthru
          _
        // Predicated region
        $region37: #{tpu_custom_call.1} parent=19 // pred_check
          %p299 = pneg %p167
        $region38: #{tpu_custom_call.1} parent=19 // pred_check_branch
          %301 = sbr.rel (%p299) target = $region40
        $region39: #{tpu_custom_call.1} parent=19 // pred_region
          %s302 = sand.u32 %s22, 1
          %s303 = scalar_lea.sflag [#allocation10], %s302
          %s304 = sand.u32 %s157, 1
          %s305 = smul.addr %s304, 4
          %s306 = scalar_lea.vmem [#allocation11], %s305
          %308 = vsyncadd %s303, 0
          %s309 = smul.addr %s22, 4
          %s310 = scalar_lea.hbm %s5, %s309
          %s312 = sshll.u32 %s310, 4
          %s313 = int_to_ptr.hbm [resolvable:$true] %s312
          %s314 = sshll.u32 %s306, 4
          %s315 = int_to_ptr.vmem [resolvable:$true] %s314
          %317 = dma.hbm_to_vmem [thread:$0]  %s313, 64, %s315, %s303
        $region40: #{tpu_custom_call.1} parent=19 // pred_fallthru
          _
      $region20: #{tpu_custom_call.1} parent=5 // pred_fallthru
        _
      %p318 = scmp.le.s32.totalorder 1, %s22
      %p319 = scmp.lt.s32.totalorder %s22, 3
      %p320 = pnand %p318, %p319
      %p321 = pneg %p320
      // Predicated region
      $region41: #{tpu_custom_call.1} parent=5 // pred_check
        _
      $region42: #{tpu_custom_call.1} parent=5 // pred_check_branch
        %323 = sbr.rel (%p320) target = $region44
      $region43: #{tpu_custom_call.1} parent=5 // pred_region
        %s324 = ssub.s32 %s22, 1
        // Predicated region
        $region45: #{tpu_custom_call.1} parent=43 // pred_check
          %p325 = pneg %p43
        $region46: #{tpu_custom_call.1} parent=43 // pred_check_branch
          %327 = sbr.rel (%p325) target = $region48
        $region47: #{tpu_custom_call.1} parent=43 // pred_region
          %329 = dma.done [#allocation4], 640
        $region48: #{tpu_custom_call.1} parent=43 // pred_fallthru
          _
        %s330 = sand.u32 %s27, 1
        %s331 = scalar_lea.sflag [#allocation7], %s330
        %s332 = sand.u32 %s56, 1
        %s333 = smul.addr %s332, 16
        %s334 = scalar_lea.vmem [#allocation6], %s333
        // Predicated region
        $region49: #{tpu_custom_call.1} parent=43 // pred_check
          %p335 = pneg %p69
        $region50: #{tpu_custom_call.1} parent=43 // pred_check_branch
          %337 = sbr.rel (%p335) target = $region52
        $region51: #{tpu_custom_call.1} parent=43 // pred_region
          %339 = dma.done %s331, 256
        $region52: #{tpu_custom_call.1} parent=43 // pred_fallthru
          _
        %s340 = sand.u32 %s27, 1
        %s341 = scalar_lea.sflag [#allocation7], %s340
        %s342 = sand.u32 %s82, 1
        %s343 = scalar_lea.vmem [#allocation8], %s342
        // Predicated region
        $region53: #{tpu_custom_call.1} parent=43 // pred_check
          %p344 = pneg %p95
        $region54: #{tpu_custom_call.1} parent=43 // pred_check_branch
          %346 = sbr.rel (%p344) target = $region56
        $region55: #{tpu_custom_call.1} parent=43 // pred_region
          %348 = dma.done %s341, 16
        $region56: #{tpu_custom_call.1} parent=43 // pred_fallthru
          _
        %s349 = sand.u32 %s27, 1
        %s350 = scalar_lea.sflag [#allocation10], %s349
        %s351 = sand.u32 %s108, 1
        %s352 = smul.addr %s351, 32
        %s353 = scalar_lea.vmem [#allocation9], %s352
        // Predicated region
        $region57: #{tpu_custom_call.1} parent=43 // pred_check
          %p354 = pneg %p121
        $region58: #{tpu_custom_call.1} parent=43 // pred_check_branch
          %356 = sbr.rel (%p354) target = $region60
        $region59: #{tpu_custom_call.1} parent=43 // pred_region
          %358 = dma.done %s350, 512
        $region60: #{tpu_custom_call.1} parent=43 // pred_fallthru
          _
        %s359 = sand.u32 %s27, 1
        %s360 = scalar_lea.sflag [#allocation10], %s359
        %s361 = sand.u32 %s160, 1
        %s362 = smul.addr %s361, 4
        %s363 = scalar_lea.vmem [#allocation11], %s362
        // Predicated region
        $region61: #{tpu_custom_call.1} parent=43 // pred_check
          %p364 = pneg %p173
        $region62: #{tpu_custom_call.1} parent=43 // pred_check_branch
          %366 = sbr.rel (%p364) target = $region64
        $region63: #{tpu_custom_call.1} parent=43 // pred_region
          %368 = dma.done %s360, 64
        $region64: #{tpu_custom_call.1} parent=43 // pred_fallthru
          _
        %p369 = pneg %p43
        %p370 = pneg %p40
        %s371 = sand.u32 %s27, 1
        %s372 = scalar_lea.sflag [#allocation7], %s371
        %s373 = sand.u32 %s56, 1
        %s374 = smul.addr %s373, 16
        %s375 = scalar_lea.vmem [#allocation6], %s374
        %p376 = pneg %p69
        %p377 = pneg %p66
        %s378 = sand.u32 %s27, 1
        %s379 = scalar_lea.sflag [#allocation7], %s378
        %s380 = sand.u32 %s82, 1
        %s381 = scalar_lea.vmem [#allocation8], %s380
        %p382 = pneg %p95
        %p383 = pneg %p92
        %s384 = sand.u32 %s27, 1
        %s385 = scalar_lea.sflag [#allocation10], %s384
        %s386 = sand.u32 %s108, 1
        %s387 = smul.addr %s386, 32
        %s388 = scalar_lea.vmem [#allocation9], %s387
        %p389 = pneg %p121
        %p390 = pneg %p118
        %p391 = scmp.lt.s32.totalorder %s27, 1
        %s392 = scalar_select %p391, %s27, 1
        %s393 = scalar_lea.vmem %s4, %s392
        %p394 = pneg %p147
        %p395 = pneg %p144
        %s396 = sand.u32 %s27, 1
        %s397 = scalar_lea.sflag [#allocation10], %s396
        %s398 = sand.u32 %s160, 1
        %s399 = smul.addr %s398, 4
        %s400 = scalar_lea.vmem [#allocation11], %s399
        %p401 = pneg %p173
        %p402 = pneg %p170
        %p403 = pneg %p199
        %p404 = pneg %p196
        %s405 = sand.u32 %s186, 1
        %s406 = scalar_lea.sflag [#allocation5], %s405
        %s407 = sand.u32 %s186, 1
        %s408 = smul.addr %s407, 40
        %s409 = scalar_lea.vmem [#allocation12], %s408
        %p410 = scmp.lt.s32.totalorder %s27, 1
        %s411 = scalar_select %p410, %s27, 1
        %s412 = scalar_lea.vmem %s4, %s411
        %v413 = vld [vmem:[#allocation3] sm:$0xf]
        %v414 = vld [vmem:[#allocation3 + $0x4] sm:$0xf]
        %v415 = vld [vmem:[#allocation3 + $0x8] sm:$0xf]
        %v416 = vld [vmem:[#allocation3 + $0xc] sm:$0xf]
        %v417 = vld [vmem:[#allocation3 + $0x10] sm:$0xf]
        %v418 = vld [vmem:[#allocation3 + $0x14] sm:$0xf]
        %v419 = vld [vmem:[#allocation3 + $0x18] sm:$0xf]
        %v420 = vld [vmem:[#allocation3 + $0x1c] sm:$0xf]
        %v421 = vld [vmem:[#allocation3 + $0x20] sm:$0xf]
        %v422 = vld [vmem:[#allocation3 + $0x24] sm:$0xf]
        %v423 = vld [vmem:[%s334] sm:$0xff]
        %v424 = vld [vmem:[%s334 + $0x8] sm:$0xff]
        %v425 = vld [vmem:[%s343] sm:$0x1]
        %v427 = vperm.slane %v425, 0
        %439 = vst [vmem:[#allocation1] ss:$2 sm:$0xff] %v413
        %s440 = scalar_lea.vmem [#allocation1], 1
        %441 = vst [vmem:[%s440] ss:$2 sm:$0xff] %v414
        %s442 = scalar_lea.vmem [#allocation1], 16
        %443 = vst [vmem:[%s442] ss:$2 sm:$0xff] %v415
        %s444 = scalar_lea.vmem [#allocation1], 17
        %445 = vst [vmem:[%s444] ss:$2 sm:$0xff] %v416
        %s446 = scalar_lea.vmem [#allocation1], 32
        %447 = vst [vmem:[%s446] ss:$2 sm:$0xff] %v417
        %s448 = scalar_lea.vmem [#allocation1], 33
        %449 = vst [vmem:[%s448] ss:$2 sm:$0xff] %v418
        %s450 = scalar_lea.vmem [#allocation1], 48
        %451 = vst [vmem:[%s450] ss:$2 sm:$0xff] %v419
        %s452 = scalar_lea.vmem [#allocation1], 49
        %453 = vst [vmem:[%s452] ss:$2 sm:$0xff] %v420
        %v454 = vld.sshfl [vmem:[#allocation1] sm:$0xff pattern:$0x75316420]
        %v455 = vld.sshfl [vmem:[#allocation1 + $0x10] sm:$0xff pattern:$0x75316420]
        %v456 = vld.sshfl [vmem:[#allocation1 + $0x20] sm:$0xff pattern:$0x75316420]
        %v457 = vld.sshfl [vmem:[#allocation1 + $0x30] sm:$0xff pattern:$0x75316420]
        %458 = vst [vmem:[#allocation1] ss:$2 sm:$0xff] %v421
        %459 = vst [vmem:[%s440] ss:$2 sm:$0xff] %v422
        %v460 = vld.sshfl [vmem:[#allocation1] sm:$0xff pattern:$0x75316420]
        %vm461 = vcmask 130048
        %v462 = vsel %vm461, %v454, 0
        %v464 = vsel %vm461, %v455, 0
        %v466 = vsel %vm461, %v456, 0
        %v468 = vsel %vm461, %v457, 0
        %v470 = vsel %vm461, %v460, 0
        %472 = vmatpush.msra.mxu0 0.0
        %473 = vmatpush.msra.mxu0 0.0
        %474 = vmatpush.msra.mxu0 0.0
        %475 = vmatpush.msra.mxu0 0.0
        %476 = vmatpush.msra.mxu0 0.0
        %477 = vmatpush.msra.mxu0 0.0
        %478 = vmatpush.msra.mxu0 0.0
        %479 = vmatpush.msra.mxu0 0.0
        %480 = vmatpush.msra.mxu0 0.0
        %481 = vmatpush.msra.mxu0 0.0
        %482 = vmatpush.msra.mxu0 0.0
        %483 = vmatpush.msra.mxu0 0.0
        %484 = vmatpush.msra.mxu0 0.0
        %485 = vmatpush.msra.mxu0 0.0
        %486 = vmatpush.msra.mxu0 %v424
        %487 = vmatpush.msra.mxu0 %v423
        %488 = vmatmul.f32.gmra.mxu0 %v462
        %v489 = vpop.f32.mrf.mxu0
        %v490 = vadd.f32 %v427, %v489
        %491 = vmatmul.f32.gmra.mxu0 %v464
        %v492 = vpop.f32.mrf.mxu0
        %v493 = vadd.f32 %v427, %v492
        %494 = vmatmul.f32.gmra.mxu0 %v466
        %v495 = vpop.f32.mrf.mxu0
        %v496 = vadd.f32 %v427, %v495
        %497 = vmatmul.f32.gmra.mxu0 %v468
        %v498 = vpop.f32.mrf.mxu0
        %v499 = vadd.f32 %v427, %v498
        %500 = vmatmul.f32.gmra.mxu0 %v470
        %v501 = vpop.f32.mrf.mxu0
        %v502 = vadd.f32 %v427, %v501
        %503 = vdwg.mxu0
        %v509 = vrot.slane %v490, 4
        %v510 = vrot.slane %v493, 4
        %v511 = vrot.slane %v496, 4
        %v512 = vrot.slane %v499, 4
        %v513 = vrot.slane %v502, 4
        %vm519 = vcmask 781312
        %520 = vst.msk [vmem:[#allocation2] sm:$0xf] %vm519, %v490
        %521 = vst.msk [vmem:[#allocation2 + $0x4] sm:$0xf] %vm519, %v509
        %522 = vst.msk [vmem:[#allocation2 + $0x8] sm:$0xf] %vm519, %v493
        %523 = vst.msk [vmem:[#allocation2 + $0xc] sm:$0xf] %vm519, %v510
        %524 = vst.msk [vmem:[#allocation2 + $0x10] sm:$0xf] %vm519, %v496
        %525 = vst.msk [vmem:[#allocation2 + $0x14] sm:$0xf] %vm519, %v511
        %526 = vst.msk [vmem:[#allocation2 + $0x18] sm:$0xf] %vm519, %v499
        %527 = vst.msk [vmem:[#allocation2 + $0x1c] sm:$0xf] %vm519, %v512
        %528 = vst.msk [vmem:[#allocation2 + $0x20] sm:$0xf] %vm519, %v502
        %529 = vst.msk [vmem:[#allocation2 + $0x24] sm:$0xf] %vm519, %v513
        %v530 = vld [vmem:[%s353] sm:$0xff]
        %v531 = vld [vmem:[%s353 + $0x8] sm:$0xff]
        %v532 = vld [vmem:[%s353 + $0x10] sm:$0xff]
        %v533 = vld [vmem:[%s353 + $0x18] sm:$0xff]
        %v534 = vld [vmem:[%s412] sm:$0x1]
        %v535 = vld [vmem:[%s363] sm:$0xf]
        %p536 = scmp.eq.s32.totalorder %s27, 0
        %s537 = scalar_select %p536, 0, 9
        %s538 = smul.u32 %s537, 4
        %s539 = scalar_lea.vmem [#allocation2], %s538
        %v540 = vld [vmem:[%s539] sm:$0xf]
        %vm541 = vcmask 261120
        %v543 = vsel %vm541, %v535, 0
        %545 = vmatpush.msra.mxu0 0.0
        %546 = vmatpush.msra.mxu0 0.0
        %547 = vmatpush.msra.mxu0 0.0
        %548 = vmatpush.msra.mxu0 0.0
        %549 = vmatpush.msra.mxu0 0.0
        %550 = vmatpush.msra.mxu0 0.0
        %551 = vmatpush.msra.mxu0 0.0
        %552 = vmatpush.msra.mxu0 0.0
        %553 = vmatpush.msra.mxu0 0.0
        %554 = vmatpush.msra.mxu0 0.0
        %555 = vmatpush.msra.mxu0 0.0
        %556 = vmatpush.msra.mxu0 0.0
        %557 = vmatpush.msra.mxu0 %v533
        %558 = vmatpush.msra.mxu0 %v532
        %559 = vmatpush.msra.mxu0 %v531
        %560 = vmatpush.msra.mxu0 %v530
        %561 = vmatmul.f32.gmra.mxu0 %v543
        %v562 = vpop.f32.mrf.mxu0
        %v563 = vadd.f32 0.0, %v562
        %564 = vdwg.mxu0
        %v565 = vadd.f32 %v540, %v563
        %v566 = vxor.u32 %v565, 2147483648
        %v567 = vmul.f32 %v566, 1.442695
        %v568 = vpow.pop %v567
        %v569 = vadd.f32 %v568, 1.0
        %v570 = vrcp.pop %v569
        %v571 = vmul.f32 %v569, %v570
        %v572 = vsub.f32 1.0, %v571
        %v573 = vmul.f32 %v570, %v572
        %v574 = vadd.f32 %v570, %v573
        %vm575 = vweird.f32 %v569
        %vm576 = vweird.f32 %v570
        %vm577 = vmor %vm575, %vm576
        %v578 = vsel %vm577, %v570, %v574
        %v579 = vand.u32 2147483647, %v569
        %vm580 = vcmp.eq.f32.partialorder %v579, 8.507059e+37
        %v581 = vand.u32 %v569, 2147483648
        %v582 = vor.u32 1.1754944e-38, %v581
        %v583 = vsel %vm580, %v582, %v578
        %v584 = vmul.f32 1.0, %v583
        %v586 = vperm.slane %v534, 0
        %587 = vrot.lane.b32.xlu0 %v586, 64
        %v588 = vpop.permute.xlu0 %587
        %v590 = vadd.f32 %v563, %v588
        %592 = vrot.lane.b32.xlu0 %v590, 64
        %v593 = vpop.permute.xlu0 %592
        %v595 = vmul.f32 %v584, %v593
        %597 = vrot.lane.b32.xlu0 %v595, 64
        %v598 = vpop.permute.xlu0 %597
        %v600 = vadd.f32 %v540, %v598
        %v601 = vtanh.pop %v600
        %v602 = vsub.f32 1.0, %v584
        %604 = vrot.lane.b32.xlu0 %v601, 96
        %v605 = vpop.permute.xlu0 %604
        %v607 = vmul.f32 %v602, %v605
        %608 = vrot.lane.b32.xlu0 %v535, 32
        %v609 = vpop.permute.xlu0 %608
        %v611 = vmul.f32 %v584, %v609
        %v612 = vadd.f32 %v607, %v611
        %v613 = vmax.f32 %v612, -5.0
        %v614 = vmin.f32 %v613, 5.0
        %616 = vrot.lane.b32.xlu0 %v614, 96
        %v617 = vpop.permute.xlu0 %616
        %s619 = scalar_lea.vmem %s409, %s538 [#allocation12]
        %vm620 = vcmask 257024
        %621 = vst.msk [vmem:[%s619] sm:$0xf] %vm620, %v617
        %s622 = scalar_select %p536, 1, 8
        %s623 = smul.u32 %s622, 4
        %s624 = scalar_lea.vmem [#allocation2], %s623
        %v625 = vld [vmem:[%s624] sm:$0xf]
        %627 = vrot.lane.b32.xlu0 %v612, 96
        %v628 = vpop.permute.xlu0 %627
        %v629 = vsel %vm541, %v628, 0
        %631 = vmatpush.msra.mxu0 0.0
        %632 = vmatpush.msra.mxu0 0.0
        %633 = vmatpush.msra.mxu0 0.0
        %634 = vmatpush.msra.mxu0 0.0
        %635 = vmatpush.msra.mxu0 0.0
        %636 = vmatpush.msra.mxu0 0.0
        %637 = vmatpush.msra.mxu0 0.0
        %638 = vmatpush.msra.mxu0 0.0
        %639 = vmatpush.msra.mxu0 0.0
        %640 = vmatpush.msra.mxu0 0.0
        %641 = vmatpush.msra.mxu0 0.0
        %642 = vmatpush.msra.mxu0 0.0
        %643 = vmatpush.msra.mxu0 %v533
        %644 = vmatpush.msra.mxu0 %v532
        %645 = vmatpush.msra.mxu0 %v531
        %646 = vmatpush.msra.mxu0 %v530
        %647 = vmatmul.f32.gmra.mxu0 %v629
        %v648 = vpop.f32.mrf.mxu0
        %v649 = vadd.f32 0.0, %v648
        %650 = vdwg.mxu0
        %v651 = vadd.f32 %v625, %v649
        %v652 = vxor.u32 %v651, 2147483648
        %v653 = vmul.f32 %v652, 1.442695
        %v654 = vpow.pop %v653
        %v655 = vadd.f32 %v654, 1.0
        %v656 = vrcp.pop %v655
        %v657 = vmul.f32 %v655, %v656
        %v658 = vsub.f32 1.0, %v657
        %v659 = vmul.f32 %v656, %v658
        %v660 = vadd.f32 %v656, %v659
        %vm661 = vweird.f32 %v655
        %vm662 = vweird.f32 %v656
        %vm663 = vmor %vm661, %vm662
        %v664 = vsel %vm663, %v656, %v660
        %v665 = vand.u32 2147483647, %v655
        %vm666 = vcmp.eq.f32.partialorder %v665, 8.507059e+37
        %v667 = vand.u32 %v655, 2147483648
        %v668 = vor.u32 1.1754944e-38, %v667
        %v669 = vsel %vm666, %v668, %v664
        %v670 = vmul.f32 1.0, %v669
        %v671 = vadd.f32 %v649, %v588
        %673 = vrot.lane.b32.xlu0 %v671, 64
        %v674 = vpop.permute.xlu0 %673
        %v676 = vmul.f32 %v670, %v674
        %678 = vrot.lane.b32.xlu0 %v676, 64
        %v679 = vpop.permute.xlu0 %678
        %v681 = vadd.f32 %v625, %v679
        %v682 = vtanh.pop %v681
        %v683 = vsub.f32 1.0, %v670
        %685 = vrot.lane.b32.xlu0 %v682, 96
        %v686 = vpop.permute.xlu0 %685
        %v688 = vmul.f32 %v683, %v686
        %v689 = vmul.f32 %v670, %v612
        %v690 = vadd.f32 %v688, %v689
        %v691 = vmax.f32 %v690, -5.0
        %v692 = vmin.f32 %v691, 5.0
        %694 = vrot.lane.b32.xlu0 %v692, 96
        %v695 = vpop.permute.xlu0 %694
        %s697 = scalar_lea.vmem %s409, %s623 [#allocation12]
        %698 = vst.msk [vmem:[%s697] sm:$0xf] %vm620, %v695
        %s699 = scalar_select %p536, 2, 7
        %s700 = smul.u32 %s699, 4
        %s701 = scalar_lea.vmem [#allocation2], %s700
        %v702 = vld [vmem:[%s701] sm:$0xf]
        %704 = vrot.lane.b32.xlu0 %v690, 96
        %v705 = vpop.permute.xlu0 %704
        %v706 = vsel %vm541, %v705, 0
        %708 = vmatpush.msra.mxu0 0.0
        %709 = vmatpush.msra.mxu0 0.0
        %710 = vmatpush.msra.mxu0 0.0
        %711 = vmatpush.msra.mxu0 0.0
        %712 = vmatpush.msra.mxu0 0.0
        %713 = vmatpush.msra.mxu0 0.0
        %714 = vmatpush.msra.mxu0 0.0
        %715 = vmatpush.msra.mxu0 0.0
        %716 = vmatpush.msra.mxu0 0.0
        %717 = vmatpush.msra.mxu0 0.0
        %718 = vmatpush.msra.mxu0 0.0
        %719 = vmatpush.msra.mxu0 0.0
        %720 = vmatpush.msra.mxu0 %v533
        %721 = vmatpush.msra.mxu0 %v532
        %722 = vmatpush.msra.mxu0 %v531
        %723 = vmatpush.msra.mxu0 %v530
        %724 = vmatmul.f32.gmra.mxu0 %v706
        %v725 = vpop.f32.mrf.mxu0
        %v726 = vadd.f32 0.0, %v725
        %727 = vdwg.mxu0
        %v728 = vadd.f32 %v702, %v726
        %v729 = vxor.u32 %v728, 2147483648
        %v730 = vmul.f32 %v729, 1.442695
        %v731 = vpow.pop %v730
        %v732 = vadd.f32 %v731, 1.0
        %v733 = vrcp.pop %v732
        %v734 = vmul.f32 %v732, %v733
        %v735 = vsub.f32 1.0, %v734
        %v736 = vmul.f32 %v733, %v735
        %v737 = vadd.f32 %v733, %v736
        %vm738 = vweird.f32 %v732
        %vm739 = vweird.f32 %v733
        %vm740 = vmor %vm738, %vm739
        %v741 = vsel %vm740, %v733, %v737
        %v742 = vand.u32 2147483647, %v732
        %vm743 = vcmp.eq.f32.partialorder %v742, 8.507059e+37
        %v744 = vand.u32 %v732, 2147483648
        %v745 = vor.u32 1.1754944e-38, %v744
        %v746 = vsel %vm743, %v745, %v741
        %v747 = vmul.f32 1.0, %v746
        %v748 = vadd.f32 %v726, %v588
        %750 = vrot.lane.b32.xlu0 %v748, 64
        %v751 = vpop.permute.xlu0 %750
        %v753 = vmul.f32 %v747, %v751
        %755 = vrot.lane.b32.xlu0 %v753, 64
        %v756 = vpop.permute.xlu0 %755
        %v758 = vadd.f32 %v702, %v756
        %v759 = vtanh.pop %v758
        %v760 = vsub.f32 1.0, %v747
        %762 = vrot.lane.b32.xlu0 %v759, 96
        %v763 = vpop.permute.xlu0 %762
        %v765 = vmul.f32 %v760, %v763
        %v766 = vmul.f32 %v747, %v690
        %v767 = vadd.f32 %v765, %v766
        %v768 = vmax.f32 %v767, -5.0
        %v769 = vmin.f32 %v768, 5.0
        %771 = vrot.lane.b32.xlu0 %v769, 96
        %v772 = vpop.permute.xlu0 %771
        %s774 = scalar_lea.vmem %s409, %s700 [#allocation12]
        %775 = vst.msk [vmem:[%s774] sm:$0xf] %vm620, %v772
        %s776 = scalar_select %p536, 3, 6
        %s777 = smul.u32 %s776, 4
        %s778 = scalar_lea.vmem [#allocation2], %s777
        %v779 = vld [vmem:[%s778] sm:$0xf]
        %781 = vrot.lane.b32.xlu0 %v767, 96
        %v782 = vpop.permute.xlu0 %781
        %v783 = vsel %vm541, %v782, 0
        %785 = vmatpush.msra.mxu0 0.0
        %786 = vmatpush.msra.mxu0 0.0
        %787 = vmatpush.msra.mxu0 0.0
        %788 = vmatpush.msra.mxu0 0.0
        %789 = vmatpush.msra.mxu0 0.0
        %790 = vmatpush.msra.mxu0 0.0
        %791 = vmatpush.msra.mxu0 0.0
        %792 = vmatpush.msra.mxu0 0.0
        %793 = vmatpush.msra.mxu0 0.0
        %794 = vmatpush.msra.mxu0 0.0
        %795 = vmatpush.msra.mxu0 0.0
        %796 = vmatpush.msra.mxu0 0.0
        %797 = vmatpush.msra.mxu0 %v533
        %798 = vmatpush.msra.mxu0 %v532
        %799 = vmatpush.msra.mxu0 %v531
        %800 = vmatpush.msra.mxu0 %v530
        %801 = vmatmul.f32.gmra.mxu0 %v783
        %v802 = vpop.f32.mrf.mxu0
        %v803 = vadd.f32 0.0, %v802
        %804 = vdwg.mxu0
        %v805 = vadd.f32 %v779, %v803
        %v806 = vxor.u32 %v805, 2147483648
        %v807 = vmul.f32 %v806, 1.442695
        %v808 = vpow.pop %v807
        %v809 = vadd.f32 %v808, 1.0
        %v810 = vrcp.pop %v809
        %v811 = vmul.f32 %v809, %v810
        %v812 = vsub.f32 1.0, %v811
        %v813 = vmul.f32 %v810, %v812
        %v814 = vadd.f32 %v810, %v813
        %vm815 = vweird.f32 %v809
        %vm816 = vweird.f32 %v810
        %vm817 = vmor %vm815, %vm816
        %v818 = vsel %vm817, %v810, %v814
        %v819 = vand.u32 2147483647, %v809
        %vm820 = vcmp.eq.f32.partialorder %v819, 8.507059e+37
        %v821 = vand.u32 %v809, 2147483648
        %v822 = vor.u32 1.1754944e-38, %v821
        %v823 = vsel %vm820, %v822, %v818
        %v824 = vmul.f32 1.0, %v823
        %v825 = vadd.f32 %v803, %v588
        %827 = vrot.lane.b32.xlu0 %v825, 64
        %v828 = vpop.permute.xlu0 %827
        %v830 = vmul.f32 %v824, %v828
        %832 = vrot.lane.b32.xlu0 %v830, 64
        %v833 = vpop.permute.xlu0 %832
        %v835 = vadd.f32 %v779, %v833
        %v836 = vtanh.pop %v835
        %v837 = vsub.f32 1.0, %v824
        %839 = vrot.lane.b32.xlu0 %v836, 96
        %v840 = vpop.permute.xlu0 %839
        %v842 = vmul.f32 %v837, %v840
        %v843 = vmul.f32 %v824, %v767
        %v844 = vadd.f32 %v842, %v843
        %v845 = vmax.f32 %v844, -5.0
        %v846 = vmin.f32 %v845, 5.0
        %848 = vrot.lane.b32.xlu0 %v846, 96
        %v849 = vpop.permute.xlu0 %848
        %s851 = scalar_lea.vmem %s409, %s777 [#allocation12]
        %852 = vst.msk [vmem:[%s851] sm:$0xf] %vm620, %v849
        %s853 = scalar_select %p536, 4, 5
        %s854 = smul.u32 %s853, 4
        %s855 = scalar_lea.vmem [#allocation2], %s854
        %v856 = vld [vmem:[%s855] sm:$0xf]
        %858 = vrot.lane.b32.xlu0 %v844, 96
        %v859 = vpop.permute.xlu0 %858
        %v860 = vsel %vm541, %v859, 0
        %862 = vmatpush.msra.mxu0 0.0
        %863 = vmatpush.msra.mxu0 0.0
        %864 = vmatpush.msra.mxu0 0.0
        %865 = vmatpush.msra.mxu0 0.0
        %866 = vmatpush.msra.mxu0 0.0
        %867 = vmatpush.msra.mxu0 0.0
        %868 = vmatpush.msra.mxu0 0.0
        %869 = vmatpush.msra.mxu0 0.0
        %870 = vmatpush.msra.mxu0 0.0
        %871 = vmatpush.msra.mxu0 0.0
        %872 = vmatpush.msra.mxu0 0.0
        %873 = vmatpush.msra.mxu0 0.0
        %874 = vmatpush.msra.mxu0 %v533
        %875 = vmatpush.msra.mxu0 %v532
        %876 = vmatpush.msra.mxu0 %v531
        %877 = vmatpush.msra.mxu0 %v530
        %878 = vmatmul.f32.gmra.mxu0 %v860
        %v879 = vpop.f32.mrf.mxu0
        %v880 = vadd.f32 0.0, %v879
        %881 = vdwg.mxu0
        %v882 = vadd.f32 %v856, %v880
        %v883 = vxor.u32 %v882, 2147483648
        %v884 = vmul.f32 %v883, 1.442695
        %v885 = vpow.pop %v884
        %v886 = vadd.f32 %v885, 1.0
        %v887 = vrcp.pop %v886
        %v888 = vmul.f32 %v886, %v887
        %v889 = vsub.f32 1.0, %v888
        %v890 = vmul.f32 %v887, %v889
        %v891 = vadd.f32 %v887, %v890
        %vm892 = vweird.f32 %v886
        %vm893 = vweird.f32 %v887
        %vm894 = vmor %vm892, %vm893
        %v895 = vsel %vm894, %v887, %v891
        %v896 = vand.u32 2147483647, %v886
        %vm897 = vcmp.eq.f32.partialorder %v896, 8.507059e+37
        %v898 = vand.u32 %v886, 2147483648
        %v899 = vor.u32 1.1754944e-38, %v898
        %v900 = vsel %vm897, %v899, %v895
        %v901 = vmul.f32 1.0, %v900
        %v902 = vadd.f32 %v880, %v588
        %904 = vrot.lane.b32.xlu0 %v902, 64
        %v905 = vpop.permute.xlu0 %904
        %v907 = vmul.f32 %v901, %v905
        %909 = vrot.lane.b32.xlu0 %v907, 64
        %v910 = vpop.permute.xlu0 %909
        %v912 = vadd.f32 %v856, %v910
        %v913 = vtanh.pop %v912
        %v914 = vsub.f32 1.0, %v901
        %916 = vrot.lane.b32.xlu0 %v913, 96
        %v917 = vpop.permute.xlu0 %916
        %v919 = vmul.f32 %v914, %v917
        %v920 = vmul.f32 %v901, %v844
        %v921 = vadd.f32 %v919, %v920
        %v922 = vmax.f32 %v921, -5.0
        %v923 = vmin.f32 %v922, 5.0
        %925 = vrot.lane.b32.xlu0 %v923, 96
        %v926 = vpop.permute.xlu0 %925
        %s928 = scalar_lea.vmem %s409, %s854 [#allocation12]
        %929 = vst.msk [vmem:[%s928] sm:$0xf] %vm620, %v926
        %s930 = scalar_select %p536, 5, 4
        %s931 = smul.u32 %s930, 4
        %s932 = scalar_lea.vmem [#allocation2], %s931
        %v933 = vld [vmem:[%s932] sm:$0xf]
        %935 = vrot.lane.b32.xlu0 %v921, 96
        %v936 = vpop.permute.xlu0 %935
        %v937 = vsel %vm541, %v936, 0
        %939 = vmatpush.msra.mxu0 0.0
        %940 = vmatpush.msra.mxu0 0.0
        %941 = vmatpush.msra.mxu0 0.0
        %942 = vmatpush.msra.mxu0 0.0
        %943 = vmatpush.msra.mxu0 0.0
        %944 = vmatpush.msra.mxu0 0.0
        %945 = vmatpush.msra.mxu0 0.0
        %946 = vmatpush.msra.mxu0 0.0
        %947 = vmatpush.msra.mxu0 0.0
        %948 = vmatpush.msra.mxu0 0.0
        %949 = vmatpush.msra.mxu0 0.0
        %950 = vmatpush.msra.mxu0 0.0
        %951 = vmatpush.msra.mxu0 %v533
        %952 = vmatpush.msra.mxu0 %v532
        %953 = vmatpush.msra.mxu0 %v531
        %954 = vmatpush.msra.mxu0 %v530
        %955 = vmatmul.f32.gmra.mxu0 %v937
        %v956 = vpop.f32.mrf.mxu0
        %v957 = vadd.f32 0.0, %v956
        %958 = vdwg.mxu0
        %v959 = vadd.f32 %v933, %v957
        %v960 = vxor.u32 %v959, 2147483648
        %v961 = vmul.f32 %v960, 1.442695
        %v962 = vpow.pop %v961
        %v963 = vadd.f32 %v962, 1.0
        %v964 = vrcp.pop %v963
        %v965 = vmul.f32 %v963, %v964
        %v966 = vsub.f32 1.0, %v965
        %v967 = vmul.f32 %v964, %v966
        %v968 = vadd.f32 %v964, %v967
        %vm969 = vweird.f32 %v963
        %vm970 = vweird.f32 %v964
        %vm971 = vmor %vm969, %vm970
        %v972 = vsel %vm971, %v964, %v968
        %v973 = vand.u32 2147483647, %v963
        %vm974 = vcmp.eq.f32.partialorder %v973, 8.507059e+37
        %v975 = vand.u32 %v963, 2147483648
        %v976 = vor.u32 1.1754944e-38, %v975
        %v977 = vsel %vm974, %v976, %v972
        %v978 = vmul.f32 1.0, %v977
        %v979 = vadd.f32 %v957, %v588
        %981 = vrot.lane.b32.xlu0 %v979, 64
        %v982 = vpop.permute.xlu0 %981
        %v984 = vmul.f32 %v978, %v982
        %986 = vrot.lane.b32.xlu0 %v984, 64
        %v987 = vpop.permute.xlu0 %986
        %v989 = vadd.f32 %v933, %v987
        %v990 = vtanh.pop %v989
        %v991 = vsub.f32 1.0, %v978
        %993 = vrot.lane.b32.xlu0 %v990, 96
        %v994 = vpop.permute.xlu0 %993
        %v996 = vmul.f32 %v991, %v994
        %v997 = vmul.f32 %v978, %v921
        %v998 = vadd.f32 %v996, %v997
        %v999 = vmax.f32 %v998, -5.0
        %v1000 = vmin.f32 %v999, 5.0
        %1002 = vrot.lane.b32.xlu0 %v1000, 96
        %v1003 = vpop.permute.xlu0 %1002
        %s1005 = scalar_lea.vmem %s409, %s931 [#allocation12]
        %1006 = vst.msk [vmem:[%s1005] sm:$0xf] %vm620, %v1003
        %s1007 = scalar_select %p536, 6, 3
        %s1008 = smul.u32 %s1007, 4
        %s1009 = scalar_lea.vmem [#allocation2], %s1008
        %v1010 = vld [vmem:[%s1009] sm:$0xf]
        %1012 = vrot.lane.b32.xlu0 %v998, 96
        %v1013 = vpop.permute.xlu0 %1012
        %v1014 = vsel %vm541, %v1013, 0
        %1016 = vmatpush.msra.mxu0 0.0
        %1017 = vmatpush.msra.mxu0 0.0
        %1018 = vmatpush.msra.mxu0 0.0
        %1019 = vmatpush.msra.mxu0 0.0
        %1020 = vmatpush.msra.mxu0 0.0
        %1021 = vmatpush.msra.mxu0 0.0
        %1022 = vmatpush.msra.mxu0 0.0
        %1023 = vmatpush.msra.mxu0 0.0
        %1024 = vmatpush.msra.mxu0 0.0
        %1025 = vmatpush.msra.mxu0 0.0
        %1026 = vmatpush.msra.mxu0 0.0
        %1027 = vmatpush.msra.mxu0 0.0
        %1028 = vmatpush.msra.mxu0 %v533
        %1029 = vmatpush.msra.mxu0 %v532
        %1030 = vmatpush.msra.mxu0 %v531
        %1031 = vmatpush.msra.mxu0 %v530
        %1032 = vmatmul.f32.gmra.mxu0 %v1014
        %v1033 = vpop.f32.mrf.mxu0
        %v1034 = vadd.f32 0.0, %v1033
        %1035 = vdwg.mxu0
        %v1036 = vadd.f32 %v1010, %v1034
        %v1037 = vxor.u32 %v1036, 2147483648
        %v1038 = vmul.f32 %v1037, 1.442695
        %v1039 = vpow.pop %v1038
        %v1040 = vadd.f32 %v1039, 1.0
        %v1041 = vrcp.pop %v1040
        %v1042 = vmul.f32 %v1040, %v1041
        %v1043 = vsub.f32 1.0, %v1042
        %v1044 = vmul.f32 %v1041, %v1043
        %v1045 = vadd.f32 %v1041, %v1044
        %vm1046 = vweird.f32 %v1040
        %vm1047 = vweird.f32 %v1041
        %vm1048 = vmor %vm1046, %vm1047
        %v1049 = vsel %vm1048, %v1041, %v1045
        %v1050 = vand.u32 2147483647, %v1040
        %vm1051 = vcmp.eq.f32.partialorder %v1050, 8.507059e+37
        %v1052 = vand.u32 %v1040, 2147483648
        %v1053 = vor.u32 1.1754944e-38, %v1052
        %v1054 = vsel %vm1051, %v1053, %v1049
        %v1055 = vmul.f32 1.0, %v1054
        %v1056 = vadd.f32 %v1034, %v588
        %1058 = vrot.lane.b32.xlu0 %v1056, 64
        %v1059 = vpop.permute.xlu0 %1058
        %v1061 = vmul.f32 %v1055, %v1059
        %1063 = vrot.lane.b32.xlu0 %v1061, 64
        %v1064 = vpop.permute.xlu0 %1063
        %v1066 = vadd.f32 %v1010, %v1064
        %v1067 = vtanh.pop %v1066
        %v1068 = vsub.f32 1.0, %v1055
        %1070 = vrot.lane.b32.xlu0 %v1067, 96
        %v1071 = vpop.permute.xlu0 %1070
        %v1073 = vmul.f32 %v1068, %v1071
        %v1074 = vmul.f32 %v1055, %v998
        %v1075 = vadd.f32 %v1073, %v1074
        %v1076 = vmax.f32 %v1075, -5.0
        %v1077 = vmin.f32 %v1076, 5.0
        %1079 = vrot.lane.b32.xlu0 %v1077, 96
        %v1080 = vpop.permute.xlu0 %1079
        %s1082 = scalar_lea.vmem %s409, %s1008 [#allocation12]
        %1083 = vst.msk [vmem:[%s1082] sm:$0xf] %vm620, %v1080
        %s1084 = scalar_select %p536, 7, 2
        %s1085 = smul.u32 %s1084, 4
        %s1086 = scalar_lea.vmem [#allocation2], %s1085
        %v1087 = vld [vmem:[%s1086] sm:$0xf]
        %1089 = vrot.lane.b32.xlu0 %v1075, 96
        %v1090 = vpop.permute.xlu0 %1089
        %v1091 = vsel %vm541, %v1090, 0
        %1093 = vmatpush.msra.mxu0 0.0
        %1094 = vmatpush.msra.mxu0 0.0
        %1095 = vmatpush.msra.mxu0 0.0
        %1096 = vmatpush.msra.mxu0 0.0
        %1097 = vmatpush.msra.mxu0 0.0
        %1098 = vmatpush.msra.mxu0 0.0
        %1099 = vmatpush.msra.mxu0 0.0
        %1100 = vmatpush.msra.mxu0 0.0
        %1101 = vmatpush.msra.mxu0 0.0
        %1102 = vmatpush.msra.mxu0 0.0
        %1103 = vmatpush.msra.mxu0 0.0
        %1104 = vmatpush.msra.mxu0 0.0
        %1105 = vmatpush.msra.mxu0 %v533
        %1106 = vmatpush.msra.mxu0 %v532
        %1107 = vmatpush.msra.mxu0 %v531
        %1108 = vmatpush.msra.mxu0 %v530
        %1109 = vmatmul.f32.gmra.mxu0 %v1091
        %v1110 = vpop.f32.mrf.mxu0
        %v1111 = vadd.f32 0.0, %v1110
        %1112 = vdwg.mxu0
        %v1113 = vadd.f32 %v1087, %v1111
        %v1114 = vxor.u32 %v1113, 2147483648
        %v1115 = vmul.f32 %v1114, 1.442695
        %v1116 = vpow.pop %v1115
        %v1117 = vadd.f32 %v1116, 1.0
        %v1118 = vrcp.pop %v1117
        %v1119 = vmul.f32 %v1117, %v1118
        %v1120 = vsub.f32 1.0, %v1119
        %v1121 = vmul.f32 %v1118, %v1120
        %v1122 = vadd.f32 %v1118, %v1121
        %vm1123 = vweird.f32 %v1117
        %vm1124 = vweird.f32 %v1118
        %vm1125 = vmor %vm1123, %vm1124
        %v1126 = vsel %vm1125, %v1118, %v1122
        %v1127 = vand.u32 2147483647, %v1117
        %vm1128 = vcmp.eq.f32.partialorder %v1127, 8.507059e+37
        %v1129 = vand.u32 %v1117, 2147483648
        %v1130 = vor.u32 1.1754944e-38, %v1129
        %v1131 = vsel %vm1128, %v1130, %v1126
        %v1132 = vmul.f32 1.0, %v1131
        %v1133 = vadd.f32 %v1111, %v588
        %1135 = vrot.lane.b32.xlu0 %v1133, 64
        %v1136 = vpop.permute.xlu0 %1135
        %v1138 = vmul.f32 %v1132, %v1136
        %1140 = vrot.lane.b32.xlu0 %v1138, 64
        %v1141 = vpop.permute.xlu0 %1140
        %v1143 = vadd.f32 %v1087, %v1141
        %v1144 = vtanh.pop %v1143
        %v1145 = vsub.f32 1.0, %v1132
        %1147 = vrot.lane.b32.xlu0 %v1144, 96
        %v1148 = vpop.permute.xlu0 %1147
        %v1150 = vmul.f32 %v1145, %v1148
        %v1151 = vmul.f32 %v1132, %v1075
        %v1152 = vadd.f32 %v1150, %v1151
        %v1153 = vmax.f32 %v1152, -5.0
        %v1154 = vmin.f32 %v1153, 5.0
        %1156 = vrot.lane.b32.xlu0 %v1154, 96
        %v1157 = vpop.permute.xlu0 %1156
        %s1159 = scalar_lea.vmem %s409, %s1085 [#allocation12]
        %1160 = vst.msk [vmem:[%s1159] sm:$0xf] %vm620, %v1157
        %s1161 = scalar_select %p536, 8, 1
        %s1162 = smul.u32 %s1161, 4
        %s1163 = scalar_lea.vmem [#allocation2], %s1162
        %v1164 = vld [vmem:[%s1163] sm:$0xf]
        %1166 = vrot.lane.b32.xlu0 %v1152, 96
        %v1167 = vpop.permute.xlu0 %1166
        %v1168 = vsel %vm541, %v1167, 0
        %1170 = vmatpush.msra.mxu0 0.0
        %1171 = vmatpush.msra.mxu0 0.0
        %1172 = vmatpush.msra.mxu0 0.0
        %1173 = vmatpush.msra.mxu0 0.0
        %1174 = vmatpush.msra.mxu0 0.0
        %1175 = vmatpush.msra.mxu0 0.0
        %1176 = vmatpush.msra.mxu0 0.0
        %1177 = vmatpush.msra.mxu0 0.0
        %1178 = vmatpush.msra.mxu0 0.0
        %1179 = vmatpush.msra.mxu0 0.0
        %1180 = vmatpush.msra.mxu0 0.0
        %1181 = vmatpush.msra.mxu0 0.0
        %1182 = vmatpush.msra.mxu0 %v533
        %1183 = vmatpush.msra.mxu0 %v532
        %1184 = vmatpush.msra.mxu0 %v531
        %1185 = vmatpush.msra.mxu0 %v530
        %1186 = vmatmul.f32.gmra.mxu0 %v1168
        %v1187 = vpop.f32.mrf.mxu0
        %v1188 = vadd.f32 0.0, %v1187
        %1189 = vdwg.mxu0
        %v1190 = vadd.f32 %v1164, %v1188
        %v1191 = vxor.u32 %v1190, 2147483648
        %v1192 = vmul.f32 %v1191, 1.442695
        %v1193 = vpow.pop %v1192
        %v1194 = vadd.f32 %v1193, 1.0
        %v1195 = vrcp.pop %v1194
        %v1196 = vmul.f32 %v1194, %v1195
        %v1197 = vsub.f32 1.0, %v1196
        %v1198 = vmul.f32 %v1195, %v1197
        %v1199 = vadd.f32 %v1195, %v1198
        %vm1200 = vweird.f32 %v1194
        %vm1201 = vweird.f32 %v1195
        %vm1202 = vmor %vm1200, %vm1201
        %v1203 = vsel %vm1202, %v1195, %v1199
        %v1204 = vand.u32 2147483647, %v1194
        %vm1205 = vcmp.eq.f32.partialorder %v1204, 8.507059e+37
        %v1206 = vand.u32 %v1194, 2147483648
        %v1207 = vor.u32 1.1754944e-38, %v1206
        %v1208 = vsel %vm1205, %v1207, %v1203
        %v1209 = vmul.f32 1.0, %v1208
        %v1210 = vadd.f32 %v1188, %v588
        %1212 = vrot.lane.b32.xlu0 %v1210, 64
        %v1213 = vpop.permute.xlu0 %1212
        %v1215 = vmul.f32 %v1209, %v1213
        %1217 = vrot.lane.b32.xlu0 %v1215, 64
        %v1218 = vpop.permute.xlu0 %1217
        %v1220 = vadd.f32 %v1164, %v1218
        %v1221 = vtanh.pop %v1220
        %v1222 = vsub.f32 1.0, %v1209
        %1224 = vrot.lane.b32.xlu0 %v1221, 96
        %v1225 = vpop.permute.xlu0 %1224
        %v1227 = vmul.f32 %v1222, %v1225
        %v1228 = vmul.f32 %v1209, %v1152
        %v1229 = vadd.f32 %v1227, %v1228
        %v1230 = vmax.f32 %v1229, -5.0
        %v1231 = vmin.f32 %v1230, 5.0
        %1233 = vrot.lane.b32.xlu0 %v1231, 96
        %v1234 = vpop.permute.xlu0 %1233
        %s1236 = scalar_lea.vmem %s409, %s1162 [#allocation12]
        %1237 = vst.msk [vmem:[%s1236] sm:$0xf] %vm620, %v1234
        %s1238 = scalar_select %p536, 9, 0
        %s1239 = smul.u32 %s1238, 4
        %s1240 = scalar_lea.vmem [#allocation2], %s1239
        %v1241 = vld [vmem:[%s1240] sm:$0xf]
        %1243 = vrot.lane.b32.xlu0 %v1229, 96
        %v1244 = vpop.permute.xlu0 %1243
        %v1245 = vsel %vm541, %v1244, 0
        %1247 = vmatpush.msra.mxu0 0.0
        %1248 = vmatpush.msra.mxu0 0.0
        %1249 = vmatpush.msra.mxu0 0.0
        %1250 = vmatpush.msra.mxu0 0.0
        %1251 = vmatpush.msra.mxu0 0.0
        %1252 = vmatpush.msra.mxu0 0.0
        %1253 = vmatpush.msra.mxu0 0.0
        %1254 = vmatpush.msra.mxu0 0.0
        %1255 = vmatpush.msra.mxu0 0.0
        %1256 = vmatpush.msra.mxu0 0.0
        %1257 = vmatpush.msra.mxu0 0.0
        %1258 = vmatpush.msra.mxu0 0.0
        %1259 = vmatpush.msra.mxu0 %v533
        %1260 = vmatpush.msra.mxu0 %v532
        %1261 = vmatpush.msra.mxu0 %v531
        %1262 = vmatpush.msra.mxu0 %v530
        %1263 = vmatmul.f32.gmra.mxu0 %v1245
        %v1264 = vpop.f32.mrf.mxu0
        %v1265 = vadd.f32 0.0, %v1264
        %1266 = vdwg.mxu0
        %v1267 = vadd.f32 %v1241, %v1265
        %v1268 = vxor.u32 %v1267, 2147483648
        %v1269 = vmul.f32 %v1268, 1.442695
        %v1270 = vpow.pop %v1269
        %v1271 = vadd.f32 %v1270, 1.0
        %v1272 = vrcp.pop %v1271
        %v1273 = vmul.f32 %v1271, %v1272
        %v1274 = vsub.f32 1.0, %v1273
        %v1275 = vmul.f32 %v1272, %v1274
        %v1276 = vadd.f32 %v1272, %v1275
        %vm1277 = vweird.f32 %v1271
        %vm1278 = vweird.f32 %v1272
        %vm1279 = vmor %vm1277, %vm1278
        %v1280 = vsel %vm1279, %v1272, %v1276
        %v1281 = vand.u32 2147483647, %v1271
        %vm1282 = vcmp.eq.f32.partialorder %v1281, 8.507059e+37
        %v1283 = vand.u32 %v1271, 2147483648
        %v1284 = vor.u32 1.1754944e-38, %v1283
        %v1285 = vsel %vm1282, %v1284, %v1280
        %v1286 = vmul.f32 1.0, %v1285
        %v1287 = vadd.f32 %v1265, %v588
        %1289 = vrot.lane.b32.xlu0 %v1287, 64
        %v1290 = vpop.permute.xlu0 %1289
        %v1292 = vmul.f32 %v1286, %v1290
        %1294 = vrot.lane.b32.xlu0 %v1292, 64
        %v1295 = vpop.permute.xlu0 %1294
        %v1297 = vadd.f32 %v1241, %v1295
        %v1298 = vtanh.pop %v1297
        %v1299 = vsub.f32 1.0, %v1286
        %1301 = vrot.lane.b32.xlu0 %v1298, 96
        %v1302 = vpop.permute.xlu0 %1301
        %v1304 = vmul.f32 %v1299, %v1302
        %v1305 = vmul.f32 %v1286, %v1229
        %v1306 = vadd.f32 %v1304, %v1305
        %v1307 = vmax.f32 %v1306, -5.0
        %v1308 = vmin.f32 %v1307, 5.0
        %1310 = vrot.lane.b32.xlu0 %v1308, 96
        %v1311 = vpop.permute.xlu0 %1310
        %s1313 = scalar_lea.vmem %s409, %s1239 [#allocation12]
        %1314 = vst.msk [vmem:[%s1313] sm:$0xf] %vm620, %v1311
        %s1315 = sand.u32 %s186, 1
        %s1316 = scalar_lea.sflag [#allocation5], %s1315
        %s1317 = sand.u32 %s186, 1
        %s1318 = smul.addr %s1317, 40
        %s1319 = scalar_lea.vmem [#allocation12], %s1318
        // Predicated region
        $region65: #{tpu_custom_call.1} parent=43 // pred_check
          %p1320 = pneg %p196
        $region66: #{tpu_custom_call.1} parent=43 // pred_check_branch
          %1322 = sbr.rel (%p1320) target = $region68
        $region67: #{tpu_custom_call.1} parent=43 // pred_region
          %1324 = vsyncadd %s1316, 0
          %s1325 = smul.addr %s27, 10
          %s1326 = smul.addr %s1325, 4
          %s1327 = scalar_lea.hbm %s6, %s1326
          %s1328 = sshll.u32 %s1319, 4
          %s1329 = int_to_ptr.vmem [resolvable:$true] %s1328
          %s1330 = sshll.u32 %s1327, 4
          %s1331 = int_to_ptr.hbm [resolvable:$true] %s1330
          %1336 = dma.vmem_to_hbm [thread:$0]  %s1329, 640, %s1331, %s1316, 64, 64, 4
        $region68: #{tpu_custom_call.1} parent=43 // pred_fallthru
          _
      $region44: #{tpu_custom_call.1} parent=5 // pred_fallthru
        _
      %p1337 = scmp.le.s32.totalorder 2, %s22
      // Predicated region
      $region69: #{tpu_custom_call.1} parent=5 // pred_check
        %p1338 = pneg %p1337
      $region70: #{tpu_custom_call.1} parent=5 // pred_check_branch
        %1340 = sbr.rel (%p1338) target = $region72
      $region71: #{tpu_custom_call.1} parent=5 // pred_region
        %s1341 = ssub.s32 %s22, 2
        // Predicated region
        $region73: #{tpu_custom_call.1} parent=71 // pred_check
          %p1342 = pneg %p202
        $region74: #{tpu_custom_call.1} parent=71 // pred_check_branch
          %1344 = sbr.rel (%p1342) target = $region76
        $region75: #{tpu_custom_call.1} parent=71 // pred_region
          %s1345 = sand.u32 %s187, 1
          %s1346 = scalar_lea.sflag [#allocation5], %s1345
          %s1347 = sand.u32 %s187, 1
          %s1348 = smul.addr %s1347, 40
          %s1349 = scalar_lea.vmem [#allocation12], %s1348
          %1351 = dma.done %s1346, 640
        $region76: #{tpu_custom_call.1} parent=71 // pred_fallthru
          _
      $region72: #{tpu_custom_call.1} parent=5 // pred_fallthru
        _
    $region6: #{tpu_custom_call.1} parent=1 // loop_footer
      %s26 = sadd.s32 1, %s22
    $region7: #{tpu_custom_call.1} parent=1 // loop_footer_branch
      %21 = sbr.rel target = $region3
    $region8: #{tpu_custom_call.1} parent=1 // loop_exit
      _
    %1352 = vsyncpa [#allocation4], 1
    %s1353 = scalar_lea.sflag [#allocation4], 1
    %1354 = vsyncpa %s1353, 1
    %1355 = vsyncpa [#allocation7], 1
    %s1356 = scalar_lea.sflag [#allocation7], 1
    %1357 = vsyncpa %s1356, 1
    %1358 = vsyncpa [#allocation10], 1
    %s1359 = scalar_lea.sflag [#allocation10], 1
    %1360 = vsyncpa %s1359, 1
    %1361 = vsyncpa [#allocation5], 1
    %s1362 = scalar_lea.sflag [#allocation5], 1
    %1363 = vsyncpa %s1362, 1

</llo_original>
